<compile_context>
chip_gen: v6e
topology: v6e:2x2x1
jax: 0.10.0
libtpu: 0.0.40
codegen_flags: <defaults>
</compile_context>

<pallas_src>
import functools

import jax
import jax.numpy as jnp
from jax import lax
from jax.experimental import pallas as pl
from jax.experimental.pallas import tpu as pltpu

EPS = 1e-5
DA_HIDDEN = 512        # _ImageDA Conv1 output channels
_PARTIAL_LANES = 128   # lane-dense per-image scalar partials row
_MAX_DA_CHUNK = 512    # spatial chunk for the DA-head matmuls


def _pick_chunk(s, max_chunk=_MAX_DA_CHUNK):
    """Largest divisor of `s` that is <= max_chunk, preferring x128 (lane-aligned)."""
    if s <= max_chunk:
        return s
    for c in range(max_chunk - max_chunk % 128, 0, -128):
        if s % c == 0:
            return c
    for c in range(max_chunk, 127, -1):
        if s % c == 0:
            return c
    return s   # no usable divisor: process unchunked


def _adain_da_kernel(src_ref, tgt_ref, w1_ref, wdiff_ref,
                     fake_src_ref, fake_tgt_ref, partials_ref,
                     src_nbf_ref, tgt_nbf_ref,
                     *, src_chunk, n_src_chunks, tgt_chunk, n_tgt_chunks):
    # One image per grid step; blocks are (1, C, S) -> squeeze to (C, S).
    src = src_ref[0].astype(jnp.float32)          # (C, S_src)
    tgt = tgt_ref[0].astype(jnp.float32)          # (C, S_tgt)
    s_n = src.shape[1]
    t_n = tgt.shape[1]

    # Per-(image, channel) stats over the spatial (lane) axis.
    # torch .var(-1) is unbiased by default -> /(n-1).
    src_mean = jnp.mean(src, axis=1, keepdims=True)
    src_ctr = src - src_mean
    src_ctr2 = src_ctr * src_ctr
    src_var = jnp.sum(src_ctr2, axis=1, keepdims=True) / (s_n - 1)
    src_inv = lax.rsqrt(src_var + EPS)            # EUP
    src_norm = src_ctr * src_inv

    tgt_mean = jnp.mean(tgt, axis=1, keepdims=True)
    tgt_ctr = tgt - tgt_mean
    tgt_ctr2 = tgt_ctr * tgt_ctr
    tgt_var = jnp.sum(tgt_ctr2, axis=1, keepdims=True) / (t_n - 1)
    tgt_inv = lax.rsqrt(tgt_var + EPS)
    tgt_norm = tgt_ctr * tgt_inv

    # "chaos" mixing exactly as written in the reference:
    #   fake = other_norm * sqrt(mean + eps) + var
    # (NaNs for negative channel means propagate identically to torch.)
    fake_src_ref[0] = (tgt_norm * jnp.sqrt(src_mean + EPS)
                       + src_var).astype(fake_src_ref.dtype)
    fake_tgt_ref[0] = (src_norm * jnp.sqrt(tgt_mean + EPS)
                       + tgt_var).astype(fake_tgt_ref.dtype)

    # Third/fourth moment partial sums from the centered values:
    # sum(norm^k) == inv_std^k * sum(ctr^k) per channel (abs()/mean in wrapper).
    s_sum3 = jnp.sum(src_ctr2 * src_ctr, axis=1, keepdims=True)
    s_sum4 = jnp.sum(src_ctr2 * src_ctr2, axis=1, keepdims=True)
    t_sum3 = jnp.sum(tgt_ctr2 * tgt_ctr, axis=1, keepdims=True)
    t_sum4 = jnp.sum(tgt_ctr2 * tgt_ctr2, axis=1, keepdims=True)
    src_inv2 = src_inv * src_inv
    tgt_inv2 = tgt_inv * tgt_inv
    s3 = jnp.sum(s_sum3 * (src_inv2 * src_inv))
    s4 = jnp.sum(s_sum4 * (src_inv2 * src_inv2))
    t3 = jnp.sum(t_sum3 * (tgt_inv2 * tgt_inv))
    t4 = jnp.sum(t_sum4 * (tgt_inv2 * tgt_inv2))

    # Fused _ImageDA on the normalized features (grad_reverse == identity fwd),
    # chunked over the spatial axis so the (512, chunk) hidden stays bounded.
    # Stage bf16 copies of the norms so chunks are sliced with pl.ds and fed
    # straight to the MXU in bf16 (f32 accumulation).
    src_nbf_ref[...] = src_norm.astype(jnp.bfloat16)
    tgt_nbf_ref[...] = tgt_norm.astype(jnp.bfloat16)
    w1 = w1_ref[...]                                  # (512, C) bf16
    wdiff = wdiff_ref[...].astype(jnp.float32)        # (1, 512) = W2[0] - W2[1]

    def _da_loss(norm_ref, chunk, n_chunks, sign):
        # Per pixel: nll(log_softmax(s), label) == softplus(sign * (s0 - s1))
        # with sign=+1 for label==1 (source), sign=-1 for label==0 (target).
        def body(i, acc):
            start = pl.multiple_of(i * chunk, chunk)
            blk = norm_ref[:, pl.ds(start, chunk)]            # (C, chunk) bf16
            h = jnp.maximum(
                jnp.dot(w1, blk, preferred_element_type=jnp.float32), 0.0)
            d = jnp.dot(wdiff, h, preferred_element_type=jnp.float32) * sign
            sp = jnp.maximum(d, 0.0) + jnp.log(1.0 + jnp.exp(-jnp.abs(d)))
            return acc + jnp.sum(sp, keepdims=True)           # (1, 1)
        return lax.fori_loop(0, n_chunks, body, jnp.zeros((1, 1), jnp.float32))

    # need_backprop = 1 (source), tgt_need_backprop = 0 (target).
    loss_src = _da_loss(src_nbf_ref, src_chunk, n_src_chunks, 1.0)
    loss_tgt = _da_loss(tgt_nbf_ref, tgt_chunk, n_tgt_chunks, -1.0)

    # Pack the six per-image scalar partials into one lane-dense (1, 128) row.
    lane = lax.broadcasted_iota(jnp.int32, (1, _PARTIAL_LANES), 1)
    row = jnp.zeros((1, _PARTIAL_LANES), jnp.float32)
    for idx, val in enumerate((s3, s4, t3, t4, loss_src, loss_tgt)):
        row = jnp.where(lane == idx, val, row)
    partials_ref[0] = row


def adain_with_chaos(source_feat, target_feat, w1, w2):
    N, C, H, W = source_feat.shape
    _N, _C, _H, _W = target_feat.shape
    # The reference broadcasts source stats (N,C,1) against target_norm
    # (_N,_C,_HW) and vice versa -> requires matching batch/channel dims.
    assert N == _N and C == _C, "AdaIN chaos mixing requires matching (N, C)"
    S, _S = H * W, _H * _W

    src3d = source_feat.reshape(N, C, S)
    tgt3d = target_feat.reshape(N, C, _S)
    out_dtype = source_feat.dtype

    # DA-head weights: W1 in bf16 for the MXU (f32 accumulation in-kernel);
    # the 2-row Conv2 collapses to a single logit-difference row.
    w1_bf16 = w1.astype(jnp.bfloat16)                               # (512, C)
    wdiff = (w2[0:1, :] - w2[1:2, :]).astype(jnp.float32)           # (1, 512)

    src_chunk = _pick_chunk(S)
    tgt_chunk = _pick_chunk(_S)
    kernel = functools.partial(
        _adain_da_kernel,
        src_chunk=src_chunk, n_src_chunks=S // src_chunk,
        tgt_chunk=tgt_chunk, n_tgt_chunks=_S // tgt_chunk)

    # Advisory cost estimate + a VMEM budget sized to the double-buffered
    # blocks, the bf16 staging scratch and the chunked hidden activation
    # (2x headroom), floored at 32 MiB and capped at v7x's 64 MiB physical.
    in_isize = jnp.dtype(source_feat.dtype).itemsize
    out_isize = jnp.dtype(out_dtype).itemsize
    flops = int(N * (2 * DA_HIDDEN * C * (S + _S)      # W1 matmuls
                     + 2 * DA_HIDDEN * (S + _S)        # logit-difference dot
                     + 32 * C * (S + _S)))             # stats / mixing / moments
    transcendentals = int(N * (2 * (S + _S) + 8 * C))
    bytes_accessed = int((S + _S) * N * C * (in_isize + out_isize)
                         + DA_HIDDEN * (C * 2 + 4)
                         + N * _PARTIAL_LANES * 4)
    cost = pl.CostEstimate(flops=flops, transcendentals=transcendentals,
                           bytes_accessed=bytes_accessed)

    per_step_vmem = (2 * C * (S + _S) * in_isize                    # inputs (x2 bufs)
                     + 2 * C * (S + _S) * out_isize                 # outputs (x2 bufs)
                     + 2 * (DA_HIDDEN * C * 2 + DA_HIDDEN * 4)      # weights
                     + C * (S + _S) * 2                             # bf16 staging
                     + DA_HIDDEN * max(src_chunk, tgt_chunk) * 4    # hidden chunk
                     + 6 * C * max(S, _S) * 4)                      # f32 temporaries
    vmem_limit = int(min(max(2 * per_step_vmem, 32 << 20), 64 << 20))

    fake_src3d, fake_tgt3d, partials = pl.pallas_call(
        kernel,
        grid_spec=pltpu.PrefetchScalarGridSpec(
            num_scalar_prefetch=0,
            grid=(N,),
            in_specs=[
                pl.BlockSpec((1, C, S), lambda i: (i, 0, 0)),        # source image
                pl.BlockSpec((1, C, _S), lambda i: (i, 0, 0)),       # target image
                pl.BlockSpec((DA_HIDDEN, C), lambda i: (0, 0)),      # W1 (bf16, resident)
                pl.BlockSpec((1, DA_HIDDEN), lambda i: (0, 0)),      # W2[0]-W2[1]
            ],
            out_specs=[
                pl.BlockSpec((1, C, _S), lambda i: (i, 0, 0)),       # fake_source_feat
                pl.BlockSpec((1, C, S), lambda i: (i, 0, 0)),        # fake_target_feat
                pl.BlockSpec((1, 1, _PARTIAL_LANES), lambda i: (i, 0, 0)),
            ],
            scratch_shapes=[
                pltpu.VMEM((C, S), jnp.bfloat16),    # src_norm bf16 staging
                pltpu.VMEM((C, _S), jnp.bfloat16),   # tgt_norm bf16 staging
            ],
        ),
        out_shape=[
            jax.ShapeDtypeStruct((N, C, _S), out_dtype),
            jax.ShapeDtypeStruct((N, C, S), out_dtype),
            jax.ShapeDtypeStruct((N, 1, _PARTIAL_LANES), jnp.float32),
        ],
        compiler_params=pltpu.CompilerParams(
            dimension_semantics=("parallel",),
            vmem_limit_bytes=vmem_limit),
        cost_estimate=cost,
    )(src3d, tgt3d, w1_bf16, wdiff)

    fake_source_feat = fake_src3d.reshape(_N, _C, _H, _W)
    fake_target_feat = fake_tgt3d.reshape(N, C, H, W)

    sums = jnp.sum(partials, axis=(0, 1))                    # (128,)
    n_src = N * C * S
    n_tgt = N * C * _S
    source_skews = jnp.abs(sums[0] / n_src)
    source_kurtoses = jnp.abs(sums[1] / n_src - 3.0)
    target_skews = jnp.abs(sums[2] / n_tgt)
    target_kurtoses = jnp.abs(sums[3] / n_tgt - 3.0)
    # F.nll_loss default 'mean' reduction over the N x H x W constant-label map.
    source_norm_loss = sums[4] / (N * S)
    target_norm_loss = sums[5] / (N * _S)

    return (fake_source_feat, fake_target_feat,
            source_skews, target_skews,
            source_kurtoses, target_kurtoses,
            source_norm_loss, target_norm_loss)


if __name__ == "__main__":
    key = jax.random.PRNGKey(0)
    k1, k2, k3, k4 = jax.random.split(key, 4)

    N, C, H, W = 2, 8, 16, 16   # dim = C for _ImageDA

    # Positive features (like post-ReLU backbone activations) so sqrt(mean+eps)
    # in the "chaos" mixing stays real-valued, matching intended usage.
    source_feat = jax.random.uniform(k1, (N, C, H, W), jnp.float32, 0.1, 2.0)
    target_feat = jax.random.uniform(k2, (N, C, H, W), jnp.float32, 0.1, 2.0)

    # Deterministic synthetic _ImageDA weights (no bias), stored channel-major:
    #   Conv1.weight (512, C, 1, 1) -> (512, C); Conv2.weight (2, 512, 1, 1) -> (2, 512)
    w1 = jax.random.normal(k3, (DA_HIDDEN, C), jnp.float32) * 0.05
    w2 = jax.random.normal(k4, (2, DA_HIDDEN), jnp.float32) * 0.05

    outs = adain_with_chaos(source_feat, target_feat, w1, w2)
    jax.block_until_ready(outs)
    print("KERNEL_OK")
</pallas_src>

<mosaic_0001>
module attributes {stable_mosaic.version = 11 : i64} {
  func.func @_adain_da_kernel(%arg0: i32, %arg1: memref<1x8x256xf32, #tpu.memory_space<vmem>>, %arg2: memref<1x8x256xf32, #tpu.memory_space<vmem>>, %arg3: memref<512x8xbf16, #tpu.memory_space<vmem>>, %arg4: memref<1x512xf32, #tpu.memory_space<vmem>>, %arg5: memref<1x8x256xf32, #tpu.memory_space<vmem>>, %arg6: memref<1x8x256xf32, #tpu.memory_space<vmem>>, %arg7: memref<1x1x128xf32, #tpu.memory_space<vmem>>, %arg8: memref<8x256xbf16, #tpu.memory_space<vmem>>, %arg9: memref<8x256xbf16, #tpu.memory_space<vmem>>) attributes {dimension_semantics = [#tpu.dimension_semantics<parallel>], iteration_bounds = array<i64: 2>, scalar_prefetch = 0 : i64, scratch_operands = 2 : i64, tpu.core_type = #tpu.core_type<tc>, window_params = [{transform_indices = @transform_0, window_bounds = array<i64: 1, 8, 256>}, {transform_indices = @transform_1, window_bounds = array<i64: 1, 8, 256>}, {pipeline_mode = #tpu.pipeline_mode<synchronous>, transform_indices = @transform_2, window_bounds = array<i64: 512, 8>}, {pipeline_mode = #tpu.pipeline_mode<synchronous>, transform_indices = @transform_3, window_bounds = array<i64: 1, 512>}, {transform_indices = @transform_4, window_bounds = array<i64: 1, 8, 256>}, {transform_indices = @transform_5, window_bounds = array<i64: 1, 8, 256>}, {transform_indices = @transform_6, window_bounds = array<i64: 1, 1, 128>}]} {
    %c0 = arith.constant 0 : index
    %c0_0 = arith.constant 0 : index
    %c0_1 = arith.constant 0 : index
    %0 = vector.load %arg1[%c0, %c0_0, %c0_1] : memref<1x8x256xf32, #tpu.memory_space<vmem>>, vector<1x8x256xf32>
    %1 = vector.shape_cast %0 : vector<1x8x256xf32> to vector<8x256xf32>
    %c0_2 = arith.constant 0 : index
    %c0_3 = arith.constant 0 : index
    %c0_4 = arith.constant 0 : index
    %2 = vector.load %arg2[%c0_2, %c0_3, %c0_4] : memref<1x8x256xf32, #tpu.memory_space<vmem>>, vector<1x8x256xf32>
    %3 = vector.shape_cast %2 : vector<1x8x256xf32> to vector<8x256xf32>
    %cst = arith.constant dense<0.000000e+00> : vector<8xf32>
    %4 = vector.multi_reduction <add>, %1, %cst [1] : vector<8x256xf32> to vector<8xf32>
    %5 = vector.shape_cast %4 : vector<8xf32> to vector<8x1xf32>
    %cst_5 = arith.constant 2.560000e+02 : f32
    %6 = vector.broadcast %cst_5 : f32 to vector<8x1xf32>
    %7 = arith.divf %5, %6 : vector<8x1xf32>
    %8 = vector.broadcast %7 : vector<8x1xf32> to vector<8x256xf32>
    %9 = arith.subf %1, %8 : vector<8x256xf32>
    %10 = arith.mulf %9, %9 : vector<8x256xf32>
    %cst_6 = arith.constant dense<0.000000e+00> : vector<8xf32>
    %11 = vector.multi_reduction <add>, %10, %cst_6 [1] : vector<8x256xf32> to vector<8xf32>
    %12 = vector.shape_cast %11 : vector<8xf32> to vector<8x1xf32>
    %cst_7 = arith.constant 2.550000e+02 : f32
    %13 = vector.broadcast %cst_7 : f32 to vector<8x1xf32>
    %14 = arith.divf %12, %13 : vector<8x1xf32>
    %cst_8 = arith.constant 9.99999974E-6 : f32
    %15 = vector.broadcast %cst_8 : f32 to vector<8x1xf32>
    %16 = arith.addf %14, %15 : vector<8x1xf32>
    %17 = math.rsqrt %16 : vector<8x1xf32>
    %18 = vector.broadcast %17 : vector<8x1xf32> to vector<8x256xf32>
    %19 = arith.mulf %9, %18 : vector<8x256xf32>
    %cst_9 = arith.constant dense<0.000000e+00> : vector<8xf32>
    %20 = vector.multi_reduction <add>, %3, %cst_9 [1] : vector<8x256xf32> to vector<8xf32>
    %21 = vector.shape_cast %20 : vector<8xf32> to vector<8x1xf32>
    %cst_10 = arith.constant 2.560000e+02 : f32
    %22 = vector.broadcast %cst_10 : f32 to vector<8x1xf32>
    %23 = arith.divf %21, %22 : vector<8x1xf32>
    %24 = vector.broadcast %23 : vector<8x1xf32> to vector<8x256xf32>
    %25 = arith.subf %3, %24 : vector<8x256xf32>
    %26 = arith.mulf %25, %25 : vector<8x256xf32>
    %cst_11 = arith.constant dense<0.000000e+00> : vector<8xf32>
    %27 = vector.multi_reduction <add>, %26, %cst_11 [1] : vector<8x256xf32> to vector<8xf32>
    %28 = vector.shape_cast %27 : vector<8xf32> to vector<8x1xf32>
    %cst_12 = arith.constant 2.550000e+02 : f32
    %29 = vector.broadcast %cst_12 : f32 to vector<8x1xf32>
    %30 = arith.divf %28, %29 : vector<8x1xf32>
    %cst_13 = arith.constant 9.99999974E-6 : f32
    %31 = vector.broadcast %cst_13 : f32 to vector<8x1xf32>
    %32 = arith.addf %30, %31 : vector<8x1xf32>
    %33 = math.rsqrt %32 : vector<8x1xf32>
    %34 = vector.broadcast %33 : vector<8x1xf32> to vector<8x256xf32>
    %35 = arith.mulf %25, %34 : vector<8x256xf32>
    %cst_14 = arith.constant 9.99999974E-6 : f32
    %36 = vector.broadcast %cst_14 : f32 to vector<8x1xf32>
    %37 = arith.addf %7, %36 : vector<8x1xf32>
    %38 = math.sqrt %37 : vector<8x1xf32>
    %39 = vector.broadcast %38 : vector<8x1xf32> to vector<8x256xf32>
    %40 = arith.mulf %35, %39 : vector<8x256xf32>
    %41 = vector.broadcast %14 : vector<8x1xf32> to vector<8x256xf32>
    %42 = arith.addf %40, %41 : vector<8x256xf32>
    %c0_15 = arith.constant 0 : index
    %c0_16 = arith.constant 0 : index
    %c0_17 = arith.constant 0 : index
    %43 = vector.load %arg5[%c0_15, %c0_16, %c0_17] : memref<1x8x256xf32, #tpu.memory_space<vmem>>, vector<1x8x256xf32>
    %44 = vector.shape_cast %43 : vector<1x8x256xf32> to vector<8x256xf32>
    %45 = vector.shape_cast %42 : vector<8x256xf32> to vector<1x8x256xf32>
    tpu.vector_store %arg5[%c0_15, %c0_16, %c0_17], %45 {strides = array<i32>} : memref<1x8x256xf32, #tpu.memory_space<vmem>>, vector<1x8x256xf32>,
    %cst_18 = arith.constant 9.99999974E-6 : f32
    %46 = vector.broadcast %cst_18 : f32 to vector<8x1xf32>
    %47 = arith.addf %23, %46 : vector<8x1xf32>
    %48 = math.sqrt %47 : vector<8x1xf32>
    %49 = vector.broadcast %48 : vector<8x1xf32> to vector<8x256xf32>
    %50 = arith.mulf %19, %49 : vector<8x256xf32>
    %51 = vector.broadcast %30 : vector<8x1xf32> to vector<8x256xf32>
    %52 = arith.addf %50, %51 : vector<8x256xf32>
    %c0_19 = arith.constant 0 : index
    %c0_20 = arith.constant 0 : index
    %c0_21 = arith.constant 0 : index
    %53 = vector.load %arg6[%c0_19, %c0_20, %c0_21] : memref<1x8x256xf32, #tpu.memory_space<vmem>>, vector<1x8x256xf32>
    %54 = vector.shape_cast %53 : vector<1x8x256xf32> to vector<8x256xf32>
    %55 = vector.shape_cast %52 : vector<8x256xf32> to vector<1x8x256xf32>
    tpu.vector_store %arg6[%c0_19, %c0_20, %c0_21], %55 {strides = array<i32>} : memref<1x8x256xf32, #tpu.memory_space<vmem>>, vector<1x8x256xf32>,
    %56 = arith.mulf %10, %9 : vector<8x256xf32>
    %cst_22 = arith.constant dense<0.000000e+00> : vector<8xf32>
    %57 = vector.multi_reduction <add>, %56, %cst_22 [1] : vector<8x256xf32> to vector<8xf32>
    %58 = vector.shape_cast %57 : vector<8xf32> to vector<8x1xf32>
    %59 = arith.mulf %10, %10 : vector<8x256xf32>
    %cst_23 = arith.constant dense<0.000000e+00> : vector<8xf32>
    %60 = vector.multi_reduction <add>, %59, %cst_23 [1] : vector<8x256xf32> to vector<8xf32>
    %61 = vector.shape_cast %60 : vector<8xf32> to vector<8x1xf32>
    %62 = arith.mulf %26, %25 : vector<8x256xf32>
    %cst_24 = arith.constant dense<0.000000e+00> : vector<8xf32>
    %63 = vector.multi_reduction <add>, %62, %cst_24 [1] : vector<8x256xf32> to vector<8xf32>
    %64 = vector.shape_cast %63 : vector<8xf32> to vector<8x1xf32>
    %65 = arith.mulf %26, %26 : vector<8x256xf32>
    %cst_25 = arith.constant dense<0.000000e+00> : vector<8xf32>
    %66 = vector.multi_reduction <add>, %65, %cst_25 [1] : vector<8x256xf32> to vector<8xf32>
    %67 = vector.shape_cast %66 : vector<8xf32> to vector<8x1xf32>
    %68 = arith.mulf %17, %17 : vector<8x1xf32>
    %69 = arith.mulf %33, %33 : vector<8x1xf32>
    %70 = arith.mulf %68, %17 : vector<8x1xf32>
    %71 = arith.mulf %58, %70 : vector<8x1xf32>
    %72 = vector.shape_cast %71 : vector<8x1xf32> to vector<1x8x1xf32>
    %cst_26 = arith.constant dense<0.000000e+00> : vector<1xf32>
    %73 = vector.multi_reduction <add>, %72, %cst_26 [1, 2] : vector<1x8x1xf32> to vector<1xf32>
    %74 = vector.shape_cast %73 : vector<1xf32> to vector<1x1x1xf32>
    %75 = vector.extract %74[0, 0, 0] : f32 from vector<1x1x1xf32>
    %76 = arith.mulf %68, %68 : vector<8x1xf32>
    %77 = arith.mulf %61, %76 : vector<8x1xf32>
    %78 = vector.shape_cast %77 : vector<8x1xf32> to vector<1x8x1xf32>
    %cst_27 = arith.constant dense<0.000000e+00> : vector<1xf32>
    %79 = vector.multi_reduction <add>, %78, %cst_27 [1, 2] : vector<1x8x1xf32> to vector<1xf32>
    %80 = vector.shape_cast %79 : vector<1xf32> to vector<1x1x1xf32>
    %81 = vector.extract %80[0, 0, 0] : f32 from vector<1x1x1xf32>
    %82 = arith.mulf %69, %33 : vector<8x1xf32>
    %83 = arith.mulf %64, %82 : vector<8x1xf32>
    %84 = vector.shape_cast %83 : vector<8x1xf32> to vector<1x8x1xf32>
    %cst_28 = arith.constant dense<0.000000e+00> : vector<1xf32>
    %85 = vector.multi_reduction <add>, %84, %cst_28 [1, 2] : vector<1x8x1xf32> to vector<1xf32>
    %86 = vector.shape_cast %85 : vector<1xf32> to vector<1x1x1xf32>
    %87 = vector.extract %86[0, 0, 0] : f32 from vector<1x1x1xf32>
    %88 = arith.mulf %69, %69 : vector<8x1xf32>
    %89 = arith.mulf %67, %88 : vector<8x1xf32>
    %90 = vector.shape_cast %89 : vector<8x1xf32> to vector<1x8x1xf32>
    %cst_29 = arith.constant dense<0.000000e+00> : vector<1xf32>
    %91 = vector.multi_reduction <add>, %90, %cst_29 [1, 2] : vector<1x8x1xf32> to vector<1xf32>
    %92 = vector.shape_cast %91 : vector<1xf32> to vector<1x1x1xf32>
    %93 = vector.extract %92[0, 0, 0] : f32 from vector<1x1x1xf32>
    %94 = arith.truncf %19 : vector<8x256xf32> to vector<8x256xbf16>
    %c0_30 = arith.constant 0 : index
    %c0_31 = arith.constant 0 : index
    %95 = vector.load %arg8[%c0_30, %c0_31] : memref<8x256xbf16, #tpu.memory_space<vmem>>, vector<8x256xbf16>
    tpu.vector_store %arg8[%c0_30, %c0_31], %94 {strides = array<i32>} : memref<8x256xbf16, #tpu.memory_space<vmem>>, vector<8x256xbf16>,
    %96 = arith.truncf %35 : vector<8x256xf32> to vector<8x256xbf16>
    %c0_32 = arith.constant 0 : index
    %c0_33 = arith.constant 0 : index
    %97 = vector.load %arg9[%c0_32, %c0_33] : memref<8x256xbf16, #tpu.memory_space<vmem>>, vector<8x256xbf16>
    tpu.vector_store %arg9[%c0_32, %c0_33], %96 {strides = array<i32>} : memref<8x256xbf16, #tpu.memory_space<vmem>>, vector<8x256xbf16>,
    %c0_34 = arith.constant 0 : index
    %c0_35 = arith.constant 0 : index
    %98 = vector.load %arg3[%c0_34, %c0_35] : memref<512x8xbf16, #tpu.memory_space<vmem>>, vector<512x8xbf16>
    %c0_36 = arith.constant 0 : index
    %c0_37 = arith.constant 0 : index
    %99 = vector.load %arg4[%c0_36, %c0_37] : memref<1x512xf32, #tpu.memory_space<vmem>>, vector<1x512xf32>
    %cst_38 = arith.constant 0.000000e+00 : f32
    %100 = vector.broadcast %cst_38 : f32 to vector<1x1xf32>
    %c0_i32 = arith.constant 0 : i32
    %c256_i32 = arith.constant 256 : i32
    %101 = arith.muli %c0_i32, %c256_i32 : i32
    %102 = tpu.assume_multiple %101, 256 : i32
    %c0_39 = arith.constant 0 : index
    %103 = arith.index_cast %102 : i32 to index
    %104 = vector.load %arg8[%c0_39, %103] : memref<8x256xbf16, #tpu.memory_space<vmem>>, vector<8x256xbf16>
    %cst_40 = arith.constant dense<0.000000e+00> : vector<512x256xf32>
    %105 = tpu.matmul %98, %104, %cst_40 {dimension_numbers = #tpu.dot_dimension_numbers<[1], [0], [0], [1], [0, 0, 1, 1], [], []>} : vector<512x8xbf16>, vector<8x256xbf16>, vector<512x256xf32> -> vector<512x256xf32>
    %cst_41 = arith.constant 0.000000e+00 : f32
    %106 = vector.broadcast %cst_41 : f32 to vector<512x256xf32>
    %107 = arith.maximumf %105, %106 : vector<512x256xf32>
    %cst_42 = arith.constant dense<0.000000e+00> : vector<1x256xf32>
    %108 = tpu.matmul %99, %107, %cst_42 {dimension_numbers = #tpu.dot_dimension_numbers<[1], [0], [0], [1], [0, 0, 1, 1], [], []>} : vector<1x512xf32>, vector<512x256xf32>, vector<1x256xf32> -> vector<1x256xf32>
    %cst_43 = arith.constant 1.000000e+00 : f32
    %109 = vector.broadcast %cst_43 : f32 to vector<1x256xf32>
    %110 = arith.mulf %108, %109 : vector<1x256xf32>
    %cst_44 = arith.constant 0.000000e+00 : f32
    %111 = vector.broadcast %cst_44 : f32 to vector<1x256xf32>
    %112 = arith.maximumf %110, %111 : vector<1x256xf32>
    %113 = math.absf %110 : vector<1x256xf32>
    %cst_45 = arith.constant 0.000000e+00 : f32
    %114 = vector.broadcast %cst_45 : f32 to vector<1x256xf32>
    %115 = arith.subf %114, %113 : vector<1x256xf32>
    %116 = math.exp %115 : vector<1x256xf32>
    %cst_46 = arith.constant 1.000000e+00 : f32
    %117 = vector.broadcast %cst_46 : f32 to vector<1x256xf32>
    %118 = arith.addf %117, %116 : vector<1x256xf32>
    %119 = math.log %118 : vector<1x256xf32>
    %120 = arith.addf %112, %119 : vector<1x256xf32>
    %121 = vector.shape_cast %120 : vector<1x256xf32> to vector<1x1x256xf32>
    %cst_47 = arith.constant dense<0.000000e+00> : vector<1xf32>
    %122 = vector.multi_reduction <add>, %121, %cst_47 [1, 2] : vector<1x1x256xf32> to vector<1xf32>
    %123 = vector.shape_cast %122 : vector<1xf32> to vector<1x1x1xf32>
    %124 = vector.extract %123[0, 0, 0] : f32 from vector<1x1x1xf32>
    %125 = vector.broadcast %124 : f32 to vector<1x1xf32>
    %126 = arith.addf %100, %125 : vector<1x1xf32>
    %c1_i32 = arith.constant 1 : i32
    %cst_48 = arith.constant 0.000000e+00 : f32
    %127 = vector.broadcast %cst_48 : f32 to vector<1x1xf32>
    %c0_i32_49 = arith.constant 0 : i32
    %c256_i32_50 = arith.constant 256 : i32
    %128 = arith.muli %c0_i32_49, %c256_i32_50 : i32
    %129 = tpu.assume_multiple %128, 256 : i32
    %c0_51 = arith.constant 0 : index
    %130 = arith.index_cast %129 : i32 to index
    %131 = vector.load %arg9[%c0_51, %130] : memref<8x256xbf16, #tpu.memory_space<vmem>>, vector<8x256xbf16>
    %cst_52 = arith.constant dense<0.000000e+00> : vector<512x256xf32>
    %132 = tpu.matmul %98, %131, %cst_52 {dimension_numbers = #tpu.dot_dimension_numbers<[1], [0], [0], [1], [0, 0, 1, 1], [], []>} : vector<512x8xbf16>, vector<8x256xbf16>, vector<512x256xf32> -> vector<512x256xf32>
    %cst_53 = arith.constant 0.000000e+00 : f32
    %133 = vector.broadcast %cst_53 : f32 to vector<512x256xf32>
    %134 = arith.maximumf %132, %133 : vector<512x256xf32>
    %cst_54 = arith.constant dense<0.000000e+00> : vector<1x256xf32>
    %135 = tpu.matmul %99, %134, %cst_54 {dimension_numbers = #tpu.dot_dimension_numbers<[1], [0], [0], [1], [0, 0, 1, 1], [], []>} : vector<1x512xf32>, vector<512x256xf32>, vector<1x256xf32> -> vector<1x256xf32>
    %cst_55 = arith.constant -1.000000e+00 : f32
    %136 = vector.broadcast %cst_55 : f32 to vector<1x256xf32>
    %137 = arith.mulf %135, %136 : vector<1x256xf32>
    %cst_56 = arith.constant 0.000000e+00 : f32
    %138 = vector.broadcast %cst_56 : f32 to vector<1x256xf32>
    %139 = arith.maximumf %137, %138 : vector<1x256xf32>
    %140 = math.absf %137 : vector<1x256xf32>
    %cst_57 = arith.constant 0.000000e+00 : f32
    %141 = vector.broadcast %cst_57 : f32 to vector<1x256xf32>
    %142 = arith.subf %141, %140 : vector<1x256xf32>
    %143 = math.exp %142 : vector<1x256xf32>
    %cst_58 = arith.constant 1.000000e+00 : f32
    %144 = vector.broadcast %cst_58 : f32 to vector<1x256xf32>
    %145 = arith.addf %144, %143 : vector<1x256xf32>
    %146 = math.log %145 : vector<1x256xf32>
    %147 = arith.addf %139, %146 : vector<1x256xf32>
    %148 = vector.shape_cast %147 : vector<1x256xf32> to vector<1x1x256xf32>
    %cst_59 = arith.constant dense<0.000000e+00> : vector<1xf32>
    %149 = vector.multi_reduction <add>, %148, %cst_59 [1, 2] : vector<1x1x256xf32> to vector<1xf32>
    %150 = vector.shape_cast %149 : vector<1xf32> to vector<1x1x1xf32>
    %151 = vector.extract %150[0, 0, 0] : f32 from vector<1x1x1xf32>
    %152 = vector.broadcast %151 : f32 to vector<1x1xf32>
    %153 = arith.addf %127, %152 : vector<1x1xf32>
    %c1_i32_60 = arith.constant 1 : i32
    %154 = tpu.iota {dimensions = array<i32: 1>} : vector<1x128xi32>
    %cst_61 = arith.constant 0.000000e+00 : f32
    %155 = vector.broadcast %cst_61 : f32 to vector<1x128xf32>
    %c0_i32_62 = arith.constant 0 : i32
    %156 = vector.broadcast %c0_i32_62 : i32 to vector<1x128xi32>
    %157 = arith.cmpi eq, %154, %156 : vector<1x128xi32>
    %158 = vector.broadcast %75 : f32 to vector<1x128xf32>
    %159 = arith.select %157, %158, %155 : vector<1x128xi1>, vector<1x128xf32>
    %c1_i32_63 = arith.constant 1 : i32
    %160 = vector.broadcast %c1_i32_63 : i32 to vector<1x128xi32>
    %161 = arith.cmpi eq, %154, %160 : vector<1x128xi32>
    %162 = vector.broadcast %81 : f32 to vector<1x128xf32>
    %163 = arith.select %161, %162, %159 : vector<1x128xi1>, vector<1x128xf32>
    %c2_i32 = arith.constant 2 : i32
    %164 = vector.broadcast %c2_i32 : i32 to vector<1x128xi32>
    %165 = arith.cmpi eq, %154, %164 : vector<1x128xi32>
    %166 = vector.broadcast %87 : f32 to vector<1x128xf32>
    %167 = arith.select %165, %166, %163 : vector<1x128xi1>, vector<1x128xf32>
    %c3_i32 = arith.constant 3 : i32
    %168 = vector.broadcast %c3_i32 : i32 to vector<1x128xi32>
    %169 = arith.cmpi eq, %154, %168 : vector<1x128xi32>
    %170 = vector.broadcast %93 : f32 to vector<1x128xf32>
    %171 = arith.select %169, %170, %167 : vector<1x128xi1>, vector<1x128xf32>
    %c4_i32 = arith.constant 4 : i32
    %172 = vector.broadcast %c4_i32 : i32 to vector<1x128xi32>
    %173 = arith.cmpi eq, %154, %172 : vector<1x128xi32>
    %174 = vector.shape_cast %126 : vector<1x1xf32> to vector<1x1xf32>
    %175 = vector.broadcast %174 : vector<1x1xf32> to vector<1x128xf32>
    %176 = arith.select %173, %175, %171 : vector<1x128xi1>, vector<1x128xf32>
    %c5_i32 = arith.constant 5 : i32
    %177 = vector.broadcast %c5_i32 : i32 to vector<1x128xi32>
    %178 = arith.cmpi eq, %154, %177 : vector<1x128xi32>
    %179 = vector.shape_cast %153 : vector<1x1xf32> to vector<1x1xf32>
    %180 = vector.broadcast %179 : vector<1x1xf32> to vector<1x128xf32>
    %181 = arith.select %178, %180, %176 : vector<1x128xi1>, vector<1x128xf32>
    %c0_64 = arith.constant 0 : index
    %c0_65 = arith.constant 0 : index
    %c0_66 = arith.constant 0 : index
    %182 = vector.load %arg7[%c0_64, %c0_65, %c0_66] : memref<1x1x128xf32, #tpu.memory_space<vmem>>, vector<1x1x128xf32>
    %183 = vector.shape_cast %182 : vector<1x1x128xf32> to vector<1x128xf32>
    %184 = vector.shape_cast %181 : vector<1x128xf32> to vector<1x1x128xf32>
    tpu.vector_store %arg7[%c0_64, %c0_65, %c0_66], %184 {strides = array<i32>} : memref<1x1x128xf32, #tpu.memory_space<vmem>>, vector<1x1x128xf32>,
    return
  }
  func.func @transform_0(%arg0: i32) -> (i32, i32, i32) {
    %c0_i32 = arith.constant 0 : i32
    %c0_i32_0 = arith.constant 0 : i32
    %c0_i32_1 = arith.constant 0 : i32
    return %arg0, %c0_i32, %c0_i32_0 : i32, i32, i32
  }
  func.func @transform_1(%arg0: i32) -> (i32, i32, i32) {
    %c0_i32 = arith.constant 0 : i32
    %c0_i32_0 = arith.constant 0 : i32
    %c0_i32_1 = arith.constant 0 : i32
    return %arg0, %c0_i32, %c0_i32_0 : i32, i32, i32
  }
  func.func @transform_2(%arg0: i32) -> (i32, i32) {
    %c0_i32 = arith.constant 0 : i32
    %c0_i32_0 = arith.constant 0 : i32
    %c0_i32_1 = arith.constant 0 : i32
    return %c0_i32, %c0_i32_0 : i32, i32
  }
  func.func @transform_3(%arg0: i32) -> (i32, i32) {
    %c0_i32 = arith.constant 0 : i32
    %c0_i32_0 = arith.constant 0 : i32
    %c0_i32_1 = arith.constant 0 : i32
    return %c0_i32, %c0_i32_0 : i32, i32
  }
  func.func @transform_4(%arg0: i32) -> (i32, i32, i32) {
    %c0_i32 = arith.constant 0 : i32
    %c0_i32_0 = arith.constant 0 : i32
    %c0_i32_1 = arith.constant 0 : i32
    return %arg0, %c0_i32, %c0_i32_0 : i32, i32, i32
  }
  func.func @transform_5(%arg0: i32) -> (i32, i32, i32) {
    %c0_i32 = arith.constant 0 : i32
    %c0_i32_0 = arith.constant 0 : i32
    %c0_i32_1 = arith.constant 0 : i32
    return %arg0, %c0_i32, %c0_i32_0 : i32, i32, i32
  }
  func.func @transform_6(%arg0: i32) -> (i32, i32, i32) {
    %c0_i32 = arith.constant 0 : i32
    %c0_i32_0 = arith.constant 0 : i32
    %c0_i32_1 = arith.constant 0 : i32
    return %arg0, %c0_i32, %c0_i32_0 : i32, i32, i32
  }
}

</mosaic_0001>

<llo_original>
// kernel: tpu_custom_call.1
$region0: #{tpu_custom_call.1}
  #allocation0 [shape = 'u32[]', space=smem, size = 0x4, offset = 0x4, fixed_abs, tag = 'smem constant byte address 0x4 - core index']
  #allocation1 [shape = 'u32[144,128]{1,0:T(1,128)}', space=vmem, size = 0x12000, scoped, tag = 'internal scratch']
  #allocation2 [shape = 'bf16[8,256]{1,0:T(8,128)(2,1)}', space=vmem, size = 0x1000, scoped, tag = 'scratch operand']
  #allocation3 [shape = 'bf16[8,256]{1,0:T(8,128)(2,1)}', space=vmem, size = 0x1000, scoped, tag = 'scratch operand']
  %s0 = inlined_call_operand.vmem [shape: f32[2,8,256], index: 0, kind: input, shape index: {}]
  %s1 = inlined_call_operand.vmem [shape: f32[2,8,256], index: 1, kind: input, shape index: {}]
  %s2 = inlined_call_operand.vmem [shape: bf16[512,8], index: 2, kind: input, shape index: {}]
  %s3 = inlined_call_operand.vmem [shape: f32[1,512], index: 3, kind: input, shape index: {}]
  %s4 = inlined_call_operand.hbm [shape: f32[2,8,256], index: 4, kind: output, shape index: {0}]
  %s5 = inlined_call_operand.hbm [shape: f32[2,8,256], index: 5, kind: output, shape index: {1}]
  %s6 = inlined_call_operand.hbm [shape: f32[2,1,128], index: 6, kind: output, shape index: {2}]
  %7 = xla_tuple %s4, %s5, %s6
  %s8 = sld [smem:[#allocation0]]
  $region65: #{tpu_custom_call.1} parent=0
    _
  %s10 = ssub.s32 1, %s8
  %s11 = scalar_select 0, %s10, %s8
  $region1: #{tpu_custom_call.1} parent=0
    #allocation4 [shape = 'u8[16384]{0}', space=vmem, size = 0x4000, scoped, tag = 'output window, operand 0']
    #allocation5 [shape = 's32[2]{0}', space=sflag, size = 0x8, scoped, tag = 'scoped memory for tpu_custom_call.1']
    #allocation6 [shape = 'u8[16384]{0}', space=vmem, size = 0x4000, scoped, tag = 'output window, operand 1']
    #allocation7 [shape = 's32[2]{0}', space=sflag, size = 0x8, scoped, tag = 'scoped memory for tpu_custom_call.1']
    #allocation8 [shape = 'u8[1024]{0}', space=vmem, size = 0x400, scoped, tag = 'output window, operand 2']
    %12 = vsyncpa [#allocation5], 0
    %s13 = scalar_lea.sflag [#allocation5], 1
    %14 = vsyncpa %s13, 0
    %15 = vsyncpa [#allocation7], 0
    %s16 = scalar_lea.sflag [#allocation7], 1
    %17 = vsyncpa %s16, 0
    loop: start=0, step=1, limit=4
    $region2: #{tpu_custom_call.1} parent=1 // loop_pre_header
      _
    $region3: #{tpu_custom_call.1} parent=1 // loop_header
      %s19 = sphi 0, %s23
      %p20 = scmp.ge.s32.totalorder %s19, 4
      %s29 = sphi 0, %s31
      %s32 = sphi 0, %s29
      %s33 = sphi 0, %s32
      %s49 = sphi 0, %s33
      %s55 = sphi 0, %s57
      %s58 = sphi 0, %s55
      %s59 = sphi 0, %s58
      %s75 = sphi 0, %s59
      %s79 = sphi 0, %s79
      %s81 = sphi 0, %s79
      %s82 = sphi 0, %s81
      %s96 = sphi 0, %s82
      %s100 = sphi 0, %s100
      %s102 = sphi 0, %s100
      %s103 = sphi 0, %s102
      %s117 = sphi 0, %s103
      %s123 = sphi 0, %s125
      %s126 = sphi 0, %s123
      %s127 = sphi 0, %s126
      %s143 = sphi 0, %s127
      %s149 = sphi 0, %s151
      %s152 = sphi 0, %s149
      %s153 = sphi 0, %s152
      %s169 = sphi 0, %s153
      %s175 = sphi 0, %s177
      %s178 = sphi 0, %s175
      %s179 = sphi 0, %s178
      %s195 = sphi 0, %s179
    $region4: #{tpu_custom_call.1} parent=1 // loop_header_branch
      %22 = sbr.rel (%p20) target = $region8
    $region5: #{tpu_custom_call.1} parent=1 // loop_body
      %s24 = ssub.s32 %s19, 1
      %s25 = ssub.s32 %s19, 2
      %s26 = sadd.s32 %s19, 1
      %s27 = ssub.s32 %s19, %s26
      %p28 = scmp.eq.s32.totalorder %s27, 0
      %s30 = sadd.s32 %s29, 1
      %s31 = scalar_select %p28, %s29, %s30
      %p34 = pneg %p28
      %p35 = scmp.eq.s32.totalorder %s19, 1
      %p36 = por %p34, %p35
      %p37 = scmp.ne.s32.totalorder %s29, %s32
      %p38 = scmp.eq.s32.totalorder %s19, 0
      %p39 = por %p37, %p38
      %p40 = scmp.ne.s32.totalorder %s29, %s32
      %p41 = scmp.eq.s32.totalorder %s24, 1
      %p42 = por %p40, %p41
      %p43 = scmp.ne.s32.totalorder %s32, %s33
      %p44 = scmp.eq.s32.totalorder %s24, 0
      %p45 = por %p43, %p44
      %p46 = scmp.ne.s32.totalorder %s32, %s33
      %p47 = scmp.eq.s32.totalorder %s25, 1
      %p48 = por %p46, %p47
      %p50 = scmp.ne.s32.totalorder %s33, %s49
      %p51 = scmp.eq.s32.totalorder %s25, 0
      %p52 = por %p50, %p51
      %s53 = ssub.s32 %s19, %s26
      %p54 = scmp.eq.s32.totalorder %s53, 0
      %s56 = sadd.s32 %s55, 1
      %s57 = scalar_select %p54, %s55, %s56
      %p60 = pneg %p54
      %p61 = scmp.eq.s32.totalorder %s19, 1
      %p62 = por %p60, %p61
      %p63 = scmp.ne.s32.totalorder %s55, %s58
      %p64 = scmp.eq.s32.totalorder %s19, 0
      %p65 = por %p63, %p64
      %p66 = scmp.ne.s32.totalorder %s55, %s58
      %p67 = scmp.eq.s32.totalorder %s24, 1
      %p68 = por %p66, %p67
      %p69 = scmp.ne.s32.totalorder %s58, %s59
      %p70 = scmp.eq.s32.totalorder %s24, 0
      %p71 = por %p69, %p70
      %p72 = scmp.ne.s32.totalorder %s58, %s59
      %p73 = scmp.eq.s32.totalorder %s25, 1
      %p74 = por %p72, %p73
      %p76 = scmp.ne.s32.totalorder %s59, %s75
      %p77 = scmp.eq.s32.totalorder %s25, 0
      %p78 = por %p76, %p77
      %s80 = sadd.s32 %s79, 1
      %p83 = scmp.eq.s32.totalorder %s19, 1
      %p84 = scmp.ne.s32.totalorder %s79, %s81
      %p85 = scmp.eq.s32.totalorder %s19, 0
      %p86 = por %p84, %p85
      %p87 = scmp.ne.s32.totalorder %s79, %s81
      %p88 = scmp.eq.s32.totalorder %s24, 1
      %p89 = por %p87, %p88
      %p90 = scmp.ne.s32.totalorder %s81, %s82
      %p91 = scmp.eq.s32.totalorder %s24, 0
      %p92 = por %p90, %p91
      %p93 = scmp.ne.s32.totalorder %s81, %s82
      %p94 = scmp.eq.s32.totalorder %s25, 1
      %p95 = por %p93, %p94
      %p97 = scmp.ne.s32.totalorder %s82, %s96
      %p98 = scmp.eq.s32.totalorder %s25, 0
      %p99 = por %p97, %p98
      %s101 = sadd.s32 %s100, 1
      %p104 = scmp.eq.s32.totalorder %s19, 1
      %p105 = scmp.ne.s32.totalorder %s100, %s102
      %p106 = scmp.eq.s32.totalorder %s19, 0
      %p107 = por %p105, %p106
      %p108 = scmp.ne.s32.totalorder %s100, %s102
      %p109 = scmp.eq.s32.totalorder %s24, 1
      %p110 = por %p108, %p109
      %p111 = scmp.ne.s32.totalorder %s102, %s103
      %p112 = scmp.eq.s32.totalorder %s24, 0
      %p113 = por %p111, %p112
      %p114 = scmp.ne.s32.totalorder %s102, %s103
      %p115 = scmp.eq.s32.totalorder %s25, 1
      %p116 = por %p114, %p115
      %p118 = scmp.ne.s32.totalorder %s103, %s117
      %p119 = scmp.eq.s32.totalorder %s25, 0
      %p120 = por %p118, %p119
      %s121 = ssub.s32 %s19, %s26
      %p122 = scmp.eq.s32.totalorder %s121, 0
      %s124 = sadd.s32 %s123, 1
      %s125 = scalar_select %p122, %s123, %s124
      %p128 = pneg %p122
      %p129 = scmp.eq.s32.totalorder %s19, 1
      %p130 = por %p128, %p129
      %p131 = scmp.ne.s32.totalorder %s123, %s126
      %p132 = scmp.eq.s32.totalorder %s19, 0
      %p133 = por %p131, %p132
      %p134 = scmp.ne.s32.totalorder %s123, %s126
      %p135 = scmp.eq.s32.totalorder %s24, 1
      %p136 = por %p134, %p135
      %p137 = scmp.ne.s32.totalorder %s126, %s127
      %p138 = scmp.eq.s32.totalorder %s24, 0
      %p139 = por %p137, %p138
      %p140 = scmp.ne.s32.totalorder %s126, %s127
      %p141 = scmp.eq.s32.totalorder %s25, 1
      %p142 = por %p140, %p141
      %p144 = scmp.ne.s32.totalorder %s127, %s143
      %p145 = scmp.eq.s32.totalorder %s25, 0
      %p146 = por %p144, %p145
      %s147 = ssub.s32 %s19, %s26
      %p148 = scmp.eq.s32.totalorder %s147, 0
      %s150 = sadd.s32 %s149, 1
      %s151 = scalar_select %p148, %s149, %s150
      %p154 = pneg %p148
      %p155 = scmp.eq.s32.totalorder %s19, 1
      %p156 = por %p154, %p155
      %p157 = scmp.ne.s32.totalorder %s149, %s152
      %p158 = scmp.eq.s32.totalorder %s19, 0
      %p159 = por %p157, %p158
      %p160 = scmp.ne.s32.totalorder %s149, %s152
      %p161 = scmp.eq.s32.totalorder %s24, 1
      %p162 = por %p160, %p161
      %p163 = scmp.ne.s32.totalorder %s152, %s153
      %p164 = scmp.eq.s32.totalorder %s24, 0
      %p165 = por %p163, %p164
      %p166 = scmp.ne.s32.totalorder %s152, %s153
      %p167 = scmp.eq.s32.totalorder %s25, 1
      %p168 = por %p166, %p167
      %p170 = scmp.ne.s32.totalorder %s153, %s169
      %p171 = scmp.eq.s32.totalorder %s25, 0
      %p172 = por %p170, %p171
      %s173 = ssub.s32 %s19, %s26
      %p174 = scmp.eq.s32.totalorder %s173, 0
      %s176 = sadd.s32 %s175, 1
      %s177 = scalar_select %p174, %s175, %s176
      %p180 = pneg %p174
      %p181 = scmp.eq.s32.totalorder %s19, 1
      %p182 = por %p180, %p181
      %p183 = scmp.ne.s32.totalorder %s175, %s178
      %p184 = scmp.eq.s32.totalorder %s19, 0
      %p185 = por %p183, %p184
      %p186 = scmp.ne.s32.totalorder %s175, %s178
      %p187 = scmp.eq.s32.totalorder %s24, 1
      %p188 = por %p186, %p187
      %p189 = scmp.ne.s32.totalorder %s178, %s179
      %p190 = scmp.eq.s32.totalorder %s24, 0
      %p191 = por %p189, %p190
      %p192 = scmp.ne.s32.totalorder %s178, %s179
      %p193 = scmp.eq.s32.totalorder %s25, 1
      %p194 = por %p192, %p193
      %p196 = scmp.ne.s32.totalorder %s179, %s195
      %p197 = scmp.eq.s32.totalorder %s25, 0
      %p198 = por %p196, %p197
      %p199 = scmp.le.s32.totalorder 1, %s19
      %p200 = scmp.lt.s32.totalorder %s19, 3
      %p201 = pnand %p199, %p200
      %p202 = pneg %p201
      // Predicated region
      $region9: #{tpu_custom_call.1} parent=5 // pred_check
        _
      $region10: #{tpu_custom_call.1} parent=5 // pred_check_branch
        %204 = sbr.rel (%p201) target = $region12
      $region11: #{tpu_custom_call.1} parent=5 // pred_region
        %s205 = ssub.s32 %s19, 1
        // Predicated region
        $region13: #{tpu_custom_call.1} parent=11 // pred_check
          %p206 = pneg %p92
        $region14: #{tpu_custom_call.1} parent=11 // pred_check_branch
          %208 = sbr.rel (%p206) target = $region16
        $region15: #{tpu_custom_call.1} parent=11 // pred_region
          _
        $region16: #{tpu_custom_call.1} parent=11 // pred_fallthru
          _
        // Predicated region
        $region17: #{tpu_custom_call.1} parent=11 // pred_check
          %p209 = pneg %p113
        $region18: #{tpu_custom_call.1} parent=11 // pred_check_branch
          %211 = sbr.rel (%p209) target = $region20
        $region19: #{tpu_custom_call.1} parent=11 // pred_region
          _
        $region20: #{tpu_custom_call.1} parent=11 // pred_fallthru
          _
      $region12: #{tpu_custom_call.1} parent=5 // pred_fallthru
        _
      %p212 = scmp.lt.s32.totalorder %s19, 2
      // Predicated region
      $region21: #{tpu_custom_call.1} parent=5 // pred_check
        %p213 = pneg %p212
      $region22: #{tpu_custom_call.1} parent=5 // pred_check_branch
        %215 = sbr.rel (%p213) target = $region24
      $region23: #{tpu_custom_call.1} parent=5 // pred_region
        // Predicated region
        $region25: #{tpu_custom_call.1} parent=23 // pred_check
          %p216 = pneg %p39
        $region26: #{tpu_custom_call.1} parent=23 // pred_check_branch
          %218 = sbr.rel (%p216) target = $region28
        $region27: #{tpu_custom_call.1} parent=23 // pred_region
          %p219 = scmp.lt.s32.totalorder %s19, 1
          %s220 = scalar_select %p219, %s19, 1
          %s221 = smul.addr %s220, 2
          %s222 = smul.addr %s221, 8
          %s223 = scalar_lea.vmem %s0, %s222
        $region28: #{tpu_custom_call.1} parent=23 // pred_fallthru
          _
        // Predicated region
        $region29: #{tpu_custom_call.1} parent=23 // pred_check
          %p224 = pneg %p65
        $region30: #{tpu_custom_call.1} parent=23 // pred_check_branch
          %226 = sbr.rel (%p224) target = $region32
        $region31: #{tpu_custom_call.1} parent=23 // pred_region
          %p227 = scmp.lt.s32.totalorder %s19, 1
          %s228 = scalar_select %p227, %s19, 1
          %s229 = smul.addr %s228, 2
          %s230 = smul.addr %s229, 8
          %s231 = scalar_lea.vmem %s1, %s230
        $region32: #{tpu_custom_call.1} parent=23 // pred_fallthru
          _
      $region24: #{tpu_custom_call.1} parent=5 // pred_fallthru
        _
      %p232 = scmp.le.s32.totalorder 1, %s19
      %p233 = scmp.lt.s32.totalorder %s19, 3
      %p234 = pnand %p232, %p233
      %p235 = pneg %p234
      // Predicated region
      $region33: #{tpu_custom_call.1} parent=5 // pred_check
        _
      $region34: #{tpu_custom_call.1} parent=5 // pred_check_branch
        %237 = sbr.rel (%p234) target = $region36
      $region35: #{tpu_custom_call.1} parent=5 // pred_region
        %s238 = ssub.s32 %s19, 1
        %p239 = scmp.lt.s32.totalorder %s24, 1
        %s240 = scalar_select %p239, %s24, 1
        %s241 = smul.addr %s240, 2
        %s242 = smul.addr %s241, 8
        %s243 = scalar_lea.vmem %s0, %s242
        %p244 = pneg %p45
        %p245 = pneg %p42
        %p246 = scmp.lt.s32.totalorder %s24, 1
        %s247 = scalar_select %p246, %s24, 1
        %s248 = smul.addr %s247, 2
        %s249 = smul.addr %s248, 8
        %s250 = scalar_lea.vmem %s1, %s249
        %p251 = pneg %p71
        %p252 = pneg %p68
        %p253 = pneg %p92
        %p254 = pneg %p89
        %p255 = pneg %p113
        %p256 = pneg %p110
        %p257 = pneg %p139
        %p258 = pneg %p136
        %s259 = sand.u32 %s126, 1
        %s260 = scalar_lea.sflag [#allocation5], %s259
        %s261 = sand.u32 %s126, 1
        %s262 = smul.addr %s261, 16
        %s263 = scalar_lea.vmem [#allocation4], %s262
        %p264 = pneg %p165
        %p265 = pneg %p162
        %s266 = sand.u32 %s24, 1
        %s267 = scalar_lea.sflag [#allocation7], %s266
        %s268 = sand.u32 %s152, 1
        %s269 = smul.addr %s268, 16
        %s270 = scalar_lea.vmem [#allocation6], %s269
        %p271 = pneg %p191
        %p272 = pneg %p188
        %s273 = sand.u32 %s24, 1
        %s274 = scalar_lea.sflag [#allocation7], %s273
        %s275 = sand.u32 %s178, 1
        %s276 = scalar_lea.vmem [#allocation8], %s275
        %p277 = scmp.lt.s32.totalorder %s24, 1
        %s278 = scalar_select %p277, %s24, 1
        %s279 = smul.addr %s278, 2
        %s280 = smul.addr %s279, 8
        %s281 = scalar_lea.vmem %s0, %s280
        %p282 = scmp.lt.s32.totalorder %s24, 1
        %s283 = scalar_select %p282, %s24, 1
        %s284 = smul.addr %s283, 2
        %s285 = smul.addr %s284, 8
        %s286 = scalar_lea.vmem %s1, %s285
        %v288 = vld [vmem:[%s281] sm:$0xff]
        %v289 = vld [vmem:[%s281 + $0x8] sm:$0xff]
        %v290 = vld [vmem:[%s286] sm:$0xff]
        %v291 = vld [vmem:[%s286 + $0x8] sm:$0xff]
        %v292 = vadd.f32 %v288, %v289
        %293 = vadd.xlane.f32.xlu0 %v292
        %v294 = vpop.xlane.xlu0 %293
        %v295 = vrcp.pop 256.0
        %v296 = vmul.f32 %v294, %v295
        %v297 = vsub.f32 %v288, %v296
        %v298 = vsub.f32 %v289, %v296
        %v299 = vmul.f32 %v297, %v297
        %v300 = vmul.f32 %v298, %v298
        %v301 = vadd.f32 %v299, %v300
        %302 = vadd.xlane.f32.xlu0 %v301
        %v303 = vpop.xlane.xlu0 %302
        %v304 = vrcp.pop 255.0
        %v305 = vmul.f32 %v303, %v304
        %v306 = vadd.f32 %v305, 1e-05
        %v307 = vrsqrt.pop %v306
        %v308 = vmul.f32 %v297, %v307
        %v309 = vmul.f32 %v298, %v307
        %v310 = vadd.f32 %v290, %v291
        %311 = vadd.xlane.f32.xlu0 %v310
        %v312 = vpop.xlane.xlu0 %311
        %v313 = vmul.f32 %v312, %v295
        %v314 = vsub.f32 %v290, %v313
        %v315 = vsub.f32 %v291, %v313
        %v316 = vmul.f32 %v314, %v314
        %v317 = vmul.f32 %v315, %v315
        %v318 = vadd.f32 %v316, %v317
        %319 = vadd.xlane.f32.xlu0 %v318
        %v320 = vpop.xlane.xlu0 %319
        %v321 = vmul.f32 %v320, %v304
        %v322 = vadd.f32 %v321, 1e-05
        %v323 = vrsqrt.pop %v322
        %v324 = vmul.f32 %v314, %v323
        %v325 = vmul.f32 %v315, %v323
        %v326 = vadd.f32 %v296, 1e-05
        %v327 = vrsqrt.pop %v326
        %v328 = vmul.f32 %v326, %v327
        %vm329 = vcmp.eq.f32.partialorder %v326, inf
        %v330 = vsel %vm329, %v326, %v328
        %vm331 = vcmp.eq.f32.partialorder %v326, 0.0
        %v332 = vand.u32 %v326, 2147483648
        %v333 = vsel %vm331, %v332, %v330
        %v334 = vmul.f32 %v324, %v333
        %v335 = vmul.f32 %v325, %v333
        %v336 = vadd.f32 %v334, %v305
        %v337 = vadd.f32 %v335, %v305
        %338 = vst [vmem:[%s263] sm:$0xff] %v336
        %339 = vst [vmem:[%s263 + $0x8] sm:$0xff] %v337
        %v340 = vadd.f32 %v313, 1e-05
        %v341 = vrsqrt.pop %v340
        %v342 = vmul.f32 %v340, %v341
        %vm343 = vcmp.eq.f32.partialorder %v340, inf
        %v344 = vsel %vm343, %v340, %v342
        %vm345 = vcmp.eq.f32.partialorder %v340, 0.0
        %v346 = vand.u32 %v340, 2147483648
        %v347 = vsel %vm345, %v346, %v344
        %v348 = vmul.f32 %v308, %v347
        %v349 = vmul.f32 %v309, %v347
        %v350 = vadd.f32 %v348, %v321
        %v351 = vadd.f32 %v349, %v321
        %352 = vst [vmem:[%s270] sm:$0xff] %v350
        %353 = vst [vmem:[%s270 + $0x8] sm:$0xff] %v351
        %v354 = vmul.f32 %v299, %v297
        %v355 = vmul.f32 %v300, %v298
        %v356 = vadd.f32 %v354, %v355
        %357 = vadd.xlane.f32.xlu0 %v356
        %v358 = vpop.xlane.xlu0 %357
        %v359 = vmul.f32 %v299, %v299
        %v360 = vmul.f32 %v300, %v300
        %v361 = vadd.f32 %v359, %v360
        %362 = vadd.xlane.f32.xlu0 %v361
        %v363 = vpop.xlane.xlu0 %362
        %v364 = vmul.f32 %v316, %v314
        %v365 = vmul.f32 %v317, %v315
        %v366 = vadd.f32 %v364, %v365
        %367 = vadd.xlane.f32.xlu0 %v366
        %v368 = vpop.xlane.xlu0 %367
        %v369 = vmul.f32 %v316, %v316
        %v370 = vmul.f32 %v317, %v317
        %v371 = vadd.f32 %v369, %v370
        %372 = vadd.xlane.f32.xlu0 %v371
        %v373 = vpop.xlane.xlu0 %372
        %v374 = vmul.f32 %v307, %v307
        %v375 = vmul.f32 %v323, %v323
        %v376 = vmul.f32 %v374, %v307
        %v377 = vmul.f32 %v358, %v376
        %vm378 = vcmask 7168
        %v379 = vsel %vm378, %v377, 0.0
        %380 = vadd.xlane.f32.xlu0 %v379
        %v381 = vpop.xlane.xlu0 %380
        %v382 = vrot.slane %v381, 4
        %v383 = vadd.f32 %v381, %v382
        %v384 = vrot.slane %v383, 2
        %v385 = vadd.f32 %v383, %v384
        %v386 = vrot.slane %v385, 1
        %v387 = vadd.f32 %v385, %v386
        %s388 = vtos %v387
        %v389 = vmul.f32 %v374, %v374
        %v390 = vmul.f32 %v363, %v389
        %v391 = vsel %vm378, %v390, 0.0
        %392 = vadd.xlane.f32.xlu0 %v391
        %v393 = vpop.xlane.xlu0 %392
        %v394 = vrot.slane %v393, 4
        %v395 = vadd.f32 %v393, %v394
        %v396 = vrot.slane %v395, 2
        %v397 = vadd.f32 %v395, %v396
        %v398 = vrot.slane %v397, 1
        %v399 = vadd.f32 %v397, %v398
        %s400 = vtos %v399
        %v401 = vmul.f32 %v375, %v323
        %v402 = vmul.f32 %v368, %v401
        %v403 = vsel %vm378, %v402, 0.0
        %404 = vadd.xlane.f32.xlu0 %v403
        %v405 = vpop.xlane.xlu0 %404
        %v406 = vrot.slane %v405, 4
        %v407 = vadd.f32 %v405, %v406
        %v408 = vrot.slane %v407, 2
        %v409 = vadd.f32 %v407, %v408
        %v410 = vrot.slane %v409, 1
        %v411 = vadd.f32 %v409, %v410
        %s412 = vtos %v411
        %v413 = vmul.f32 %v375, %v375
        %v414 = vmul.f32 %v373, %v413
        %v415 = vsel %vm378, %v414, 0.0
        %416 = vadd.xlane.f32.xlu0 %v415
        %v417 = vpop.xlane.xlu0 %416
        %v418 = vrot.slane %v417, 4
        %v419 = vadd.f32 %v417, %v418
        %v420 = vrot.slane %v419, 2
        %v421 = vadd.f32 %v419, %v420
        %v422 = vrot.slane %v421, 1
        %v423 = vadd.f32 %v421, %v422
        %s424 = vtos %v423
        %v425 = vpack.c.bf16 %v308, %v308
        %v426 = vpack.c.bf16 %v309, %v309
        %v429 = vunpack.c.l.b16 %v425
        %v430 = vunpack.c.l.b16 %v426
        %v431 = vpack.c.b16 %v430, %v429
        %433 = vst [vmem:[#allocation2] sm:$0xff] %v431
        %v434 = vpack.c.bf16 %v324, %v324
        %v435 = vpack.c.bf16 %v325, %v325
        %v438 = vunpack.c.l.b16 %v434
        %v439 = vunpack.c.l.b16 %v435
        %v440 = vpack.c.b16 %v439, %v438
        %442 = vst [vmem:[#allocation3] sm:$0xff] %v440
        %v443 = vld [vmem:[%s2] sm:$0xf]
        %v444 = vld [vmem:[%s2 + $0x4] sm:$0xf]
        %v445 = vld [vmem:[%s2 + $0x8] sm:$0xf]
        %v446 = vld [vmem:[%s2 + $0xc] sm:$0xf]
        %v447 = vld [vmem:[%s2 + $0x10] sm:$0xf]
        %v448 = vld [vmem:[%s2 + $0x14] sm:$0xf]
        %v449 = vld [vmem:[%s2 + $0x18] sm:$0xf]
        %v450 = vld [vmem:[%s2 + $0x1c] sm:$0xf]
        %v451 = vld [vmem:[%s2 + $0x20] sm:$0xf]
        %v452 = vld [vmem:[%s2 + $0x24] sm:$0xf]
        %v453 = vld [vmem:[%s2 + $0x28] sm:$0xf]
        %v454 = vld [vmem:[%s2 + $0x2c] sm:$0xf]
        %v455 = vld [vmem:[%s2 + $0x30] sm:$0xf]
        %v456 = vld [vmem:[%s2 + $0x34] sm:$0xf]
        %v457 = vld [vmem:[%s2 + $0x38] sm:$0xf]
        %v458 = vld [vmem:[%s2 + $0x3c] sm:$0xf]
        %v459 = vld [vmem:[%s2 + $0x40] sm:$0xf]
        %v460 = vld [vmem:[%s2 + $0x44] sm:$0xf]
        %v461 = vld [vmem:[%s2 + $0x48] sm:$0xf]
        %v462 = vld [vmem:[%s2 + $0x4c] sm:$0xf]
        %v463 = vld [vmem:[%s2 + $0x50] sm:$0xf]
        %v464 = vld [vmem:[%s2 + $0x54] sm:$0xf]
        %v465 = vld [vmem:[%s2 + $0x58] sm:$0xf]
        %v466 = vld [vmem:[%s2 + $0x5c] sm:$0xf]
        %v467 = vld [vmem:[%s2 + $0x60] sm:$0xf]
        %v468 = vld [vmem:[%s2 + $0x64] sm:$0xf]
        %v469 = vld [vmem:[%s2 + $0x68] sm:$0xf]
        %v470 = vld [vmem:[%s2 + $0x6c] sm:$0xf]
        %v471 = vld [vmem:[%s2 + $0x70] sm:$0xf]
        %v472 = vld [vmem:[%s2 + $0x74] sm:$0xf]
        %v473 = vld [vmem:[%s2 + $0x78] sm:$0xf]
        %v474 = vld [vmem:[%s2 + $0x7c] sm:$0xf]
        %v475 = vld [vmem:[%s2 + $0x80] sm:$0xf]
        %v476 = vld [vmem:[%s2 + $0x84] sm:$0xf]
        %v477 = vld [vmem:[%s2 + $0x88] sm:$0xf]
        %v478 = vld [vmem:[%s2 + $0x8c] sm:$0xf]
        %v479 = vld [vmem:[%s2 + $0x90] sm:$0xf]
        %v480 = vld [vmem:[%s2 + $0x94] sm:$0xf]
        %v481 = vld [vmem:[%s2 + $0x98] sm:$0xf]
        %v482 = vld [vmem:[%s2 + $0x9c] sm:$0xf]
        %v483 = vld [vmem:[%s2 + $0xa0] sm:$0xf]
        %v484 = vld [vmem:[%s2 + $0xa4] sm:$0xf]
        %v485 = vld [vmem:[%s2 + $0xa8] sm:$0xf]
        %v486 = vld [vmem:[%s2 + $0xac] sm:$0xf]
        %v487 = vld [vmem:[%s2 + $0xb0] sm:$0xf]
        %v488 = vld [vmem:[%s2 + $0xb4] sm:$0xf]
        %v489 = vld [vmem:[%s2 + $0xb8] sm:$0xf]
        %v490 = vld [vmem:[%s2 + $0xbc] sm:$0xf]
        %v491 = vld [vmem:[%s2 + $0xc0] sm:$0xf]
        %v492 = vld [vmem:[%s2 + $0xc4] sm:$0xf]
        %v493 = vld [vmem:[%s2 + $0xc8] sm:$0xf]
        %v494 = vld [vmem:[%s2 + $0xcc] sm:$0xf]
        %v495 = vld [vmem:[%s2 + $0xd0] sm:$0xf]
        %v496 = vld [vmem:[%s2 + $0xd4] sm:$0xf]
        %v497 = vld [vmem:[%s2 + $0xd8] sm:$0xf]
        %v498 = vld [vmem:[%s2 + $0xdc] sm:$0xf]
        %v499 = vld [vmem:[%s2 + $0xe0] sm:$0xf]
        %v500 = vld [vmem:[%s2 + $0xe4] sm:$0xf]
        %v501 = vld [vmem:[%s2 + $0xe8] sm:$0xf]
        %v502 = vld [vmem:[%s2 + $0xec] sm:$0xf]
        %v503 = vld [vmem:[%s2 + $0xf0] sm:$0xf]
        %v504 = vld [vmem:[%s2 + $0xf4] sm:$0xf]
        %v505 = vld [vmem:[%s2 + $0xf8] sm:$0xf]
        %v506 = vld [vmem:[%s2 + $0xfc] sm:$0xf]
        %v507 = vld [vmem:[%s3] sm:$0xf]
        %v508 = vld [vmem:[#allocation2] sm:$0xff]
        %v573 = vunpack.c.l.b16 %v443
        %v574 = vunpack.c.l.b16 %v444
        %v575 = vunpack.c.l.b16 %v445
        %v576 = vunpack.c.l.b16 %v446
        %v577 = vunpack.c.l.b16 %v447
        %v578 = vunpack.c.l.b16 %v448
        %v579 = vunpack.c.l.b16 %v449
        %v580 = vunpack.c.l.b16 %v450
        %v581 = vunpack.c.l.b16 %v451
        %v582 = vunpack.c.l.b16 %v452
        %v583 = vunpack.c.l.b16 %v453
        %v584 = vunpack.c.l.b16 %v454
        %v585 = vunpack.c.l.b16 %v455
        %v586 = vunpack.c.l.b16 %v456
        %v587 = vunpack.c.l.b16 %v457
        %v588 = vunpack.c.l.b16 %v458
        %v589 = vunpack.c.l.b16 %v459
        %v590 = vunpack.c.l.b16 %v460
        %v591 = vunpack.c.l.b16 %v461
        %v592 = vunpack.c.l.b16 %v462
        %v593 = vunpack.c.l.b16 %v463
        %v594 = vunpack.c.l.b16 %v464
        %v595 = vunpack.c.l.b16 %v465
        %v596 = vunpack.c.l.b16 %v466
        %v597 = vunpack.c.l.b16 %v467
        %v598 = vunpack.c.l.b16 %v468
        %v599 = vunpack.c.l.b16 %v469
        %v600 = vunpack.c.l.b16 %v470
        %v601 = vunpack.c.l.b16 %v471
        %v602 = vunpack.c.l.b16 %v472
        %v603 = vunpack.c.l.b16 %v473
        %v604 = vunpack.c.l.b16 %v474
        %v605 = vunpack.c.l.b16 %v475
        %v606 = vunpack.c.l.b16 %v476
        %v607 = vunpack.c.l.b16 %v477
        %v608 = vunpack.c.l.b16 %v478
        %v609 = vunpack.c.l.b16 %v479
        %v610 = vunpack.c.l.b16 %v480
        %v611 = vunpack.c.l.b16 %v481
        %v612 = vunpack.c.l.b16 %v482
        %v613 = vunpack.c.l.b16 %v483
        %v614 = vunpack.c.l.b16 %v484
        %v615 = vunpack.c.l.b16 %v485
        %v616 = vunpack.c.l.b16 %v486
        %v617 = vunpack.c.l.b16 %v487
        %v618 = vunpack.c.l.b16 %v488
        %v619 = vunpack.c.l.b16 %v489
        %v620 = vunpack.c.l.b16 %v490
        %v621 = vunpack.c.l.b16 %v491
        %v622 = vunpack.c.l.b16 %v492
        %v623 = vunpack.c.l.b16 %v493
        %v624 = vunpack.c.l.b16 %v494
        %v625 = vunpack.c.l.b16 %v495
        %v626 = vunpack.c.l.b16 %v496
        %v627 = vunpack.c.l.b16 %v497
        %v628 = vunpack.c.l.b16 %v498
        %v629 = vunpack.c.l.b16 %v499
        %v630 = vunpack.c.l.b16 %v500
        %v631 = vunpack.c.l.b16 %v501
        %v632 = vunpack.c.l.b16 %v502
        %v633 = vunpack.c.l.b16 %v503
        %v634 = vunpack.c.l.b16 %v504
        %v635 = vunpack.c.l.b16 %v505
        %v636 = vunpack.c.l.b16 %v506
        %v637 = vpack.c.b16 %v574, %v573
        %v638 = vpack.c.b16 %v576, %v575
        %v639 = vpack.c.b16 %v578, %v577
        %v640 = vpack.c.b16 %v580, %v579
        %v641 = vpack.c.b16 %v582, %v581
        %v642 = vpack.c.b16 %v584, %v583
        %v643 = vpack.c.b16 %v586, %v585
        %v644 = vpack.c.b16 %v588, %v587
        %v645 = vpack.c.b16 %v590, %v589
        %v646 = vpack.c.b16 %v592, %v591
        %v647 = vpack.c.b16 %v594, %v593
        %v648 = vpack.c.b16 %v596, %v595
        %v649 = vpack.c.b16 %v598, %v597
        %v650 = vpack.c.b16 %v600, %v599
        %v651 = vpack.c.b16 %v602, %v601
        %v652 = vpack.c.b16 %v604, %v603
        %v653 = vpack.c.b16 %v606, %v605
        %v654 = vpack.c.b16 %v608, %v607
        %v655 = vpack.c.b16 %v610, %v609
        %v656 = vpack.c.b16 %v612, %v611
        %v657 = vpack.c.b16 %v614, %v613
        %v658 = vpack.c.b16 %v616, %v615
        %v659 = vpack.c.b16 %v618, %v617
        %v660 = vpack.c.b16 %v620, %v619
        %v661 = vpack.c.b16 %v622, %v621
        %v662 = vpack.c.b16 %v624, %v623
        %v663 = vpack.c.b16 %v626, %v625
        %v664 = vpack.c.b16 %v628, %v627
        %v665 = vpack.c.b16 %v630, %v629
        %v666 = vpack.c.b16 %v632, %v631
        %v667 = vpack.c.b16 %v634, %v633
        %v668 = vpack.c.b16 %v636, %v635
        %v670 = vunpack.c.l.b16 %v508
        %v671 = vunpack.c.h.b16 %v508
        %v672 = vpack.c.b16 %v670, %v670
        %v673 = vpack.c.b16 %v671, %v671
        %vm674 = vcmask 64512
        %v676 = vsel %vm674, %v637, 0
        %v679 = vsel %vm674, %v638, 0
        %v682 = vsel %vm674, %v639, 0
        %v685 = vsel %vm674, %v640, 0
        %v688 = vsel %vm674, %v641, 0
        %v691 = vsel %vm674, %v642, 0
        %v694 = vsel %vm674, %v643, 0
        %v697 = vsel %vm674, %v644, 0
        %v700 = vsel %vm674, %v645, 0
        %v703 = vsel %vm674, %v646, 0
        %v706 = vsel %vm674, %v647, 0
        %v709 = vsel %vm674, %v648, 0
        %v712 = vsel %vm674, %v649, 0
        %v715 = vsel %vm674, %v650, 0
        %v718 = vsel %vm674, %v651, 0
        %v721 = vsel %vm674, %v652, 0
        %v724 = vsel %vm674, %v653, 0
        %v727 = vsel %vm674, %v654, 0
        %v730 = vsel %vm674, %v655, 0
        %v733 = vsel %vm674, %v656, 0
        %v736 = vsel %vm674, %v657, 0
        %v739 = vsel %vm674, %v658, 0
        %v742 = vsel %vm674, %v659, 0
        %v745 = vsel %vm674, %v660, 0
        %v748 = vsel %vm674, %v661, 0
        %v751 = vsel %vm674, %v662, 0
        %v754 = vsel %vm674, %v663, 0
        %v757 = vsel %vm674, %v664, 0
        %v760 = vsel %vm674, %v665, 0
        %v763 = vsel %vm674, %v666, 0
        %v766 = vsel %vm674, %v667, 0
        %v769 = vsel %vm674, %v668, 0
        %vm771 = vcmask 1043456
        %v773 = vsel %vm771, %v672, 0
        %v776 = vsel %vm771, %v673, 0
        %778 = vmatprep.subr.bf16.mxu0 0
        %779 = vmatpush1.bf16.msra.mxu0 0
        %780 = vmatprep.subr.bf16.mxu0 0
        %781 = vmatpush1.bf16.msra.mxu0 0
        %782 = vmatprep.subr.bf16.mxu0 0
        %783 = vmatpush1.bf16.msra.mxu0 0
        %784 = vmatprep.subr.bf16.mxu0 0
        %785 = vmatpush1.bf16.msra.mxu0 0
        %786 = vmatprep.subr.bf16.mxu0 0
        %787 = vmatpush1.bf16.msra.mxu0 0
        %788 = vmatprep.subr.bf16.mxu0 0
        %789 = vmatpush1.bf16.msra.mxu0 0
        %790 = vmatprep.subr.bf16.mxu0 0
        %791 = vmatpush1.bf16.msra.mxu0 0
        %792 = vmatprep.subr.bf16.mxu0 %v776
        %793 = vmatpush1.bf16.msra.mxu0 %v773
        %794 = vmatprep.subr.bf16.mxu0 0
        %795 = vmatpush2.bf16.msra.mxu0 0
        %796 = vmatprep.subr.bf16.mxu0 0
        %797 = vmatpush2.bf16.msra.mxu0 0
        %798 = vmatprep.subr.bf16.mxu0 0
        %799 = vmatpush2.bf16.msra.mxu0 0
        %800 = vmatprep.subr.bf16.mxu0 0
        %801 = vmatpush2.bf16.msra.mxu0 0
        %802 = vmatprep.subr.bf16.mxu0 0
        %803 = vmatpush2.bf16.msra.mxu0 0
        %804 = vmatprep.subr.bf16.mxu0 0
        %805 = vmatpush2.bf16.msra.mxu0 0
        %806 = vmatprep.subr.bf16.mxu0 0
        %807 = vmatpush2.bf16.msra.mxu0 0
        %808 = vmatprep.subr.bf16.mxu0 0
        %809 = vmatpush2.bf16.msra.mxu0 0
        %810 = vmatprep.mubr.bf16.mxu0 0
        %811 = vmatmul.mubr.bf16.gmra.mxu0 %v676
        %v812 = vpop.f32.mrf.mxu0
        %v813 = vadd.f32 0.0, %v812
        %v814 = vpop.f32.mrf.mxu0
        %v815 = vadd.f32 0.0, %v814
        %v816 = vpop.f32.mrf.mxu0
        %v817 = vadd.f32 0.0, %v816
        %v818 = vpop.f32.mrf.mxu0
        %v819 = vadd.f32 0.0, %v818
        %820 = vmatprep.mubr.bf16.mxu0 0
        %821 = vmatmul.mubr.bf16.gmra.mxu0 %v679
        %v822 = vpop.f32.mrf.mxu0
        %v823 = vadd.f32 0.0, %v822
        %v824 = vpop.f32.mrf.mxu0
        %v825 = vadd.f32 0.0, %v824
        %v826 = vpop.f32.mrf.mxu0
        %v827 = vadd.f32 0.0, %v826
        %v828 = vpop.f32.mrf.mxu0
        %v829 = vadd.f32 0.0, %v828
        %830 = vmatprep.mubr.bf16.mxu0 0
        %831 = vmatmul.mubr.bf16.gmra.mxu0 %v682
        %v832 = vpop.f32.mrf.mxu0
        %v833 = vadd.f32 0.0, %v832
        %v834 = vpop.f32.mrf.mxu0
        %v835 = vadd.f32 0.0, %v834
        %v836 = vpop.f32.mrf.mxu0
        %v837 = vadd.f32 0.0, %v836
        %v838 = vpop.f32.mrf.mxu0
        %v839 = vadd.f32 0.0, %v838
        %840 = vmatprep.mubr.bf16.mxu0 0
        %841 = vmatmul.mubr.bf16.gmra.mxu0 %v685
        %v842 = vpop.f32.mrf.mxu0
        %v843 = vadd.f32 0.0, %v842
        %v844 = vpop.f32.mrf.mxu0
        %v845 = vadd.f32 0.0, %v844
        %v846 = vpop.f32.mrf.mxu0
        %v847 = vadd.f32 0.0, %v846
        %v848 = vpop.f32.mrf.mxu0
        %v849 = vadd.f32 0.0, %v848
        %850 = vmatprep.mubr.bf16.mxu0 0
        %851 = vmatmul.mubr.bf16.gmra.mxu0 %v688
        %v852 = vpop.f32.mrf.mxu0
        %v853 = vadd.f32 0.0, %v852
        %v854 = vpop.f32.mrf.mxu0
        %v855 = vadd.f32 0.0, %v854
        %v856 = vpop.f32.mrf.mxu0
        %v857 = vadd.f32 0.0, %v856
        %v858 = vpop.f32.mrf.mxu0
        %v859 = vadd.f32 0.0, %v858
        %860 = vmatprep.mubr.bf16.mxu0 0
        %861 = vmatmul.mubr.bf16.gmra.mxu0 %v691
        %v862 = vpop.f32.mrf.mxu0
        %v863 = vadd.f32 0.0, %v862
        %v864 = vpop.f32.mrf.mxu0
        %v865 = vadd.f32 0.0, %v864
        %v866 = vpop.f32.mrf.mxu0
        %v867 = vadd.f32 0.0, %v866
        %v868 = vpop.f32.mrf.mxu0
        %v869 = vadd.f32 0.0, %v868
        %870 = vmatprep.mubr.bf16.mxu0 0
        %871 = vmatmul.mubr.bf16.gmra.mxu0 %v694
        %v872 = vpop.f32.mrf.mxu0
        %v873 = vadd.f32 0.0, %v872
        %v874 = vpop.f32.mrf.mxu0
        %v875 = vadd.f32 0.0, %v874
        %v876 = vpop.f32.mrf.mxu0
        %v877 = vadd.f32 0.0, %v876
        %v878 = vpop.f32.mrf.mxu0
        %v879 = vadd.f32 0.0, %v878
        %880 = vmatprep.mubr.bf16.mxu0 0
        %881 = vmatmul.mubr.bf16.gmra.mxu0 %v697
        %v882 = vpop.f32.mrf.mxu0
        %v883 = vadd.f32 0.0, %v882
        %v884 = vpop.f32.mrf.mxu0
        %v885 = vadd.f32 0.0, %v884
        %v886 = vpop.f32.mrf.mxu0
        %v887 = vadd.f32 0.0, %v886
        %v888 = vpop.f32.mrf.mxu0
        %v889 = vadd.f32 0.0, %v888
        %890 = vmatprep.mubr.bf16.mxu0 0
        %891 = vmatmul.mubr.bf16.gmra.mxu0 %v700
        %v892 = vpop.f32.mrf.mxu0
        %v893 = vadd.f32 0.0, %v892
        %v894 = vpop.f32.mrf.mxu0
        %v895 = vadd.f32 0.0, %v894
        %v896 = vpop.f32.mrf.mxu0
        %v897 = vadd.f32 0.0, %v896
        %v898 = vpop.f32.mrf.mxu0
        %v899 = vadd.f32 0.0, %v898
        %900 = vmatprep.mubr.bf16.mxu0 0
        %901 = vmatmul.mubr.bf16.gmra.mxu0 %v703
        %v902 = vpop.f32.mrf.mxu0
        %v903 = vadd.f32 0.0, %v902
        %v904 = vpop.f32.mrf.mxu0
        %v905 = vadd.f32 0.0, %v904
        %v906 = vpop.f32.mrf.mxu0
        %v907 = vadd.f32 0.0, %v906
        %v908 = vpop.f32.mrf.mxu0
        %v909 = vadd.f32 0.0, %v908
        %910 = vmatprep.mubr.bf16.mxu0 0
        %911 = vmatmul.mubr.bf16.gmra.mxu0 %v706
        %v912 = vpop.f32.mrf.mxu0
        %v913 = vadd.f32 0.0, %v912
        %v914 = vpop.f32.mrf.mxu0
        %v915 = vadd.f32 0.0, %v914
        %v916 = vpop.f32.mrf.mxu0
        %v917 = vadd.f32 0.0, %v916
        %v918 = vpop.f32.mrf.mxu0
        %v919 = vadd.f32 0.0, %v918
        %920 = vmatprep.mubr.bf16.mxu0 0
        %921 = vmatmul.mubr.bf16.gmra.mxu0 %v709
        %v922 = vpop.f32.mrf.mxu0
        %v923 = vadd.f32 0.0, %v922
        %v924 = vpop.f32.mrf.mxu0
        %v925 = vadd.f32 0.0, %v924
        %v926 = vpop.f32.mrf.mxu0
        %v927 = vadd.f32 0.0, %v926
        %v928 = vpop.f32.mrf.mxu0
        %v929 = vadd.f32 0.0, %v928
        %930 = vmatprep.mubr.bf16.mxu0 0
        %931 = vmatmul.mubr.bf16.gmra.mxu0 %v712
        %v932 = vpop.f32.mrf.mxu0
        %v933 = vadd.f32 0.0, %v932
        %v934 = vpop.f32.mrf.mxu0
        %v935 = vadd.f32 0.0, %v934
        %v936 = vpop.f32.mrf.mxu0
        %v937 = vadd.f32 0.0, %v936
        %v938 = vpop.f32.mrf.mxu0
        %v939 = vadd.f32 0.0, %v938
        %940 = vmatprep.mubr.bf16.mxu0 0
        %941 = vmatmul.mubr.bf16.gmra.mxu0 %v715
        %v942 = vpop.f32.mrf.mxu0
        %v943 = vadd.f32 0.0, %v942
        %v944 = vpop.f32.mrf.mxu0
        %v945 = vadd.f32 0.0, %v944
        %v946 = vpop.f32.mrf.mxu0
        %v947 = vadd.f32 0.0, %v946
        %v948 = vpop.f32.mrf.mxu0
        %v949 = vadd.f32 0.0, %v948
        %950 = vmatprep.mubr.bf16.mxu0 0
        %951 = vmatmul.mubr.bf16.gmra.mxu0 %v718
        %v952 = vpop.f32.mrf.mxu0
        %v953 = vadd.f32 0.0, %v952
        %v954 = vpop.f32.mrf.mxu0
        %v955 = vadd.f32 0.0, %v954
        %v956 = vpop.f32.mrf.mxu0
        %v957 = vadd.f32 0.0, %v956
        %v958 = vpop.f32.mrf.mxu0
        %v959 = vadd.f32 0.0, %v958
        %960 = vmatprep.mubr.bf16.mxu0 0
        %961 = vmatmul.mubr.bf16.gmra.mxu0 %v721
        %v962 = vpop.f32.mrf.mxu0
        %v963 = vadd.f32 0.0, %v962
        %v964 = vpop.f32.mrf.mxu0
        %v965 = vadd.f32 0.0, %v964
        %v966 = vpop.f32.mrf.mxu0
        %v967 = vadd.f32 0.0, %v966
        %v968 = vpop.f32.mrf.mxu0
        %v969 = vadd.f32 0.0, %v968
        %970 = vmatprep.mubr.bf16.mxu0 0
        %971 = vmatmul.mubr.bf16.gmra.mxu0 %v724
        %v972 = vpop.f32.mrf.mxu0
        %v973 = vadd.f32 0.0, %v972
        %v974 = vpop.f32.mrf.mxu0
        %v975 = vadd.f32 0.0, %v974
        %v976 = vpop.f32.mrf.mxu0
        %v977 = vadd.f32 0.0, %v976
        %v978 = vpop.f32.mrf.mxu0
        %v979 = vadd.f32 0.0, %v978
        %980 = vmatprep.mubr.bf16.mxu0 0
        %981 = vmatmul.mubr.bf16.gmra.mxu0 %v727
        %v982 = vpop.f32.mrf.mxu0
        %v983 = vadd.f32 0.0, %v982
        %v984 = vpop.f32.mrf.mxu0
        %v985 = vadd.f32 0.0, %v984
        %v986 = vpop.f32.mrf.mxu0
        %v987 = vadd.f32 0.0, %v986
        %v988 = vpop.f32.mrf.mxu0
        %v989 = vadd.f32 0.0, %v988
        %990 = vmatprep.mubr.bf16.mxu0 0
        %991 = vmatmul.mubr.bf16.gmra.mxu0 %v730
        %v992 = vpop.f32.mrf.mxu0
        %v993 = vadd.f32 0.0, %v992
        %v994 = vpop.f32.mrf.mxu0
        %v995 = vadd.f32 0.0, %v994
        %v996 = vpop.f32.mrf.mxu0
        %v997 = vadd.f32 0.0, %v996
        %v998 = vpop.f32.mrf.mxu0
        %v999 = vadd.f32 0.0, %v998
        %1000 = vmatprep.mubr.bf16.mxu0 0
        %1001 = vmatmul.mubr.bf16.gmra.mxu0 %v733
        %v1002 = vpop.f32.mrf.mxu0
        %v1003 = vadd.f32 0.0, %v1002
        %v1004 = vpop.f32.mrf.mxu0
        %v1005 = vadd.f32 0.0, %v1004
        %v1006 = vpop.f32.mrf.mxu0
        %v1007 = vadd.f32 0.0, %v1006
        %v1008 = vpop.f32.mrf.mxu0
        %v1009 = vadd.f32 0.0, %v1008
        %1010 = vmatprep.mubr.bf16.mxu0 0
        %1011 = vmatmul.mubr.bf16.gmra.mxu0 %v736
        %v1012 = vpop.f32.mrf.mxu0
        %v1013 = vadd.f32 0.0, %v1012
        %v1014 = vpop.f32.mrf.mxu0
        %v1015 = vadd.f32 0.0, %v1014
        %v1016 = vpop.f32.mrf.mxu0
        %v1017 = vadd.f32 0.0, %v1016
        %v1018 = vpop.f32.mrf.mxu0
        %v1019 = vadd.f32 0.0, %v1018
        %1020 = vmatprep.mubr.bf16.mxu0 0
        %1021 = vmatmul.mubr.bf16.gmra.mxu0 %v739
        %v1022 = vpop.f32.mrf.mxu0
        %v1023 = vadd.f32 0.0, %v1022
        %v1024 = vpop.f32.mrf.mxu0
        %v1025 = vadd.f32 0.0, %v1024
        %v1026 = vpop.f32.mrf.mxu0
        %v1027 = vadd.f32 0.0, %v1026
        %v1028 = vpop.f32.mrf.mxu0
        %v1029 = vadd.f32 0.0, %v1028
        %1030 = vmatprep.mubr.bf16.mxu0 0
        %1031 = vmatmul.mubr.bf16.gmra.mxu0 %v742
        %v1032 = vpop.f32.mrf.mxu0
        %v1033 = vadd.f32 0.0, %v1032
        %v1034 = vpop.f32.mrf.mxu0
        %v1035 = vadd.f32 0.0, %v1034
        %v1036 = vpop.f32.mrf.mxu0
        %v1037 = vadd.f32 0.0, %v1036
        %v1038 = vpop.f32.mrf.mxu0
        %v1039 = vadd.f32 0.0, %v1038
        %1040 = vmatprep.mubr.bf16.mxu0 0
        %1041 = vmatmul.mubr.bf16.gmra.mxu0 %v745
        %v1042 = vpop.f32.mrf.mxu0
        %v1043 = vadd.f32 0.0, %v1042
        %v1044 = vpop.f32.mrf.mxu0
        %v1045 = vadd.f32 0.0, %v1044
        %v1046 = vpop.f32.mrf.mxu0
        %v1047 = vadd.f32 0.0, %v1046
        %v1048 = vpop.f32.mrf.mxu0
        %v1049 = vadd.f32 0.0, %v1048
        %1050 = vmatprep.mubr.bf16.mxu0 0
        %1051 = vmatmul.mubr.bf16.gmra.mxu0 %v748
        %v1052 = vpop.f32.mrf.mxu0
        %v1053 = vadd.f32 0.0, %v1052
        %v1054 = vpop.f32.mrf.mxu0
        %v1055 = vadd.f32 0.0, %v1054
        %v1056 = vpop.f32.mrf.mxu0
        %v1057 = vadd.f32 0.0, %v1056
        %v1058 = vpop.f32.mrf.mxu0
        %v1059 = vadd.f32 0.0, %v1058
        %1060 = vmatprep.mubr.bf16.mxu0 0
        %1061 = vmatmul.mubr.bf16.gmra.mxu0 %v751
        %v1062 = vpop.f32.mrf.mxu0
        %v1063 = vadd.f32 0.0, %v1062
        %v1064 = vpop.f32.mrf.mxu0
        %v1065 = vadd.f32 0.0, %v1064
        %v1066 = vpop.f32.mrf.mxu0
        %v1067 = vadd.f32 0.0, %v1066
        %v1068 = vpop.f32.mrf.mxu0
        %v1069 = vadd.f32 0.0, %v1068
        %1070 = vmatprep.mubr.bf16.mxu0 0
        %1071 = vmatmul.mubr.bf16.gmra.mxu0 %v754
        %v1072 = vpop.f32.mrf.mxu0
        %v1073 = vadd.f32 0.0, %v1072
        %v1074 = vpop.f32.mrf.mxu0
        %v1075 = vadd.f32 0.0, %v1074
        %v1076 = vpop.f32.mrf.mxu0
        %v1077 = vadd.f32 0.0, %v1076
        %v1078 = vpop.f32.mrf.mxu0
        %v1079 = vadd.f32 0.0, %v1078
        %1080 = vmatprep.mubr.bf16.mxu0 0
        %1081 = vmatmul.mubr.bf16.gmra.mxu0 %v757
        %v1082 = vpop.f32.mrf.mxu0
        %v1083 = vadd.f32 0.0, %v1082
        %v1084 = vpop.f32.mrf.mxu0
        %v1085 = vadd.f32 0.0, %v1084
        %v1086 = vpop.f32.mrf.mxu0
        %v1087 = vadd.f32 0.0, %v1086
        %v1088 = vpop.f32.mrf.mxu0
        %v1089 = vadd.f32 0.0, %v1088
        %1090 = vmatprep.mubr.bf16.mxu0 0
        %1091 = vmatmul.mubr.bf16.gmra.mxu0 %v760
        %v1092 = vpop.f32.mrf.mxu0
        %v1093 = vadd.f32 0.0, %v1092
        %v1094 = vpop.f32.mrf.mxu0
        %v1095 = vadd.f32 0.0, %v1094
        %v1096 = vpop.f32.mrf.mxu0
        %v1097 = vadd.f32 0.0, %v1096
        %v1098 = vpop.f32.mrf.mxu0
        %v1099 = vadd.f32 0.0, %v1098
        %1100 = vmatprep.mubr.bf16.mxu0 0
        %1101 = vmatmul.mubr.bf16.gmra.mxu0 %v763
        %v1102 = vpop.f32.mrf.mxu0
        %v1103 = vadd.f32 0.0, %v1102
        %v1104 = vpop.f32.mrf.mxu0
        %v1105 = vadd.f32 0.0, %v1104
        %v1106 = vpop.f32.mrf.mxu0
        %v1107 = vadd.f32 0.0, %v1106
        %v1108 = vpop.f32.mrf.mxu0
        %v1109 = vadd.f32 0.0, %v1108
        %1110 = vmatprep.mubr.bf16.mxu0 0
        %1111 = vmatmul.mubr.bf16.gmra.mxu0 %v766
        %v1112 = vpop.f32.mrf.mxu0
        %v1113 = vadd.f32 0.0, %v1112
        %v1114 = vpop.f32.mrf.mxu0
        %v1115 = vadd.f32 0.0, %v1114
        %v1116 = vpop.f32.mrf.mxu0
        %v1117 = vadd.f32 0.0, %v1116
        %v1118 = vpop.f32.mrf.mxu0
        %v1119 = vadd.f32 0.0, %v1118
        %1120 = vmatprep.mubr.bf16.mxu0 0
        %1121 = vmatmul.mubr.bf16.gmra.mxu0 %v769
        %v1122 = vpop.f32.mrf.mxu0
        %v1123 = vadd.f32 0.0, %v1122
        %v1124 = vpop.f32.mrf.mxu0
        %v1125 = vadd.f32 0.0, %v1124
        %v1126 = vpop.f32.mrf.mxu0
        %v1127 = vadd.f32 0.0, %v1126
        %v1128 = vpop.f32.mrf.mxu0
        %v1129 = vadd.f32 0.0, %v1128
        %1130 = vdwg.mxu0
        %v1131 = vmax.f32 %v813, 0.0
        %v1132 = vmax.f32 %v815, 0.0
        %v1133 = vmax.f32 %v817, 0.0
        %v1134 = vmax.f32 %v819, 0.0
        %v1135 = vmax.f32 %v823, 0.0
        %v1136 = vmax.f32 %v825, 0.0
        %v1137 = vmax.f32 %v827, 0.0
        %v1138 = vmax.f32 %v829, 0.0
        %v1139 = vmax.f32 %v833, 0.0
        %v1140 = vmax.f32 %v835, 0.0
        %v1141 = vmax.f32 %v837, 0.0
        %v1142 = vmax.f32 %v839, 0.0
        %v1143 = vmax.f32 %v843, 0.0
        %v1144 = vmax.f32 %v845, 0.0
        %v1145 = vmax.f32 %v847, 0.0
        %v1146 = vmax.f32 %v849, 0.0
        %v1147 = vmax.f32 %v853, 0.0
        %v1148 = vmax.f32 %v855, 0.0
        %v1149 = vmax.f32 %v857, 0.0
        %v1150 = vmax.f32 %v859, 0.0
        %v1151 = vmax.f32 %v863, 0.0
        %v1152 = vmax.f32 %v865, 0.0
        %v1153 = vmax.f32 %v867, 0.0
        %v1154 = vmax.f32 %v869, 0.0
        %v1155 = vmax.f32 %v873, 0.0
        %v1156 = vmax.f32 %v875, 0.0
        %v1157 = vmax.f32 %v877, 0.0
        %v1158 = vmax.f32 %v879, 0.0
        %v1159 = vmax.f32 %v883, 0.0
        %v1160 = vmax.f32 %v885, 0.0
        %v1161 = vmax.f32 %v887, 0.0
        %v1162 = vmax.f32 %v889, 0.0
        %v1163 = vmax.f32 %v893, 0.0
        %v1164 = vmax.f32 %v895, 0.0
        %v1165 = vmax.f32 %v897, 0.0
        %v1166 = vmax.f32 %v899, 0.0
        %v1167 = vmax.f32 %v903, 0.0
        %v1168 = vmax.f32 %v905, 0.0
        %v1169 = vmax.f32 %v907, 0.0
        %v1170 = vmax.f32 %v909, 0.0
        %v1171 = vmax.f32 %v913, 0.0
        %v1172 = vmax.f32 %v915, 0.0
        %v1173 = vmax.f32 %v917, 0.0
        %v1174 = vmax.f32 %v919, 0.0
        %v1175 = vmax.f32 %v923, 0.0
        %v1176 = vmax.f32 %v925, 0.0
        %v1177 = vmax.f32 %v927, 0.0
        %v1178 = vmax.f32 %v929, 0.0
        %v1179 = vmax.f32 %v933, 0.0
        %v1180 = vmax.f32 %v935, 0.0
        %v1181 = vmax.f32 %v937, 0.0
        %v1182 = vmax.f32 %v939, 0.0
        %v1183 = vmax.f32 %v943, 0.0
        %v1184 = vmax.f32 %v945, 0.0
        %v1185 = vmax.f32 %v947, 0.0
        %v1186 = vmax.f32 %v949, 0.0
        %v1187 = vmax.f32 %v953, 0.0
        %v1188 = vmax.f32 %v955, 0.0
        %v1189 = vmax.f32 %v957, 0.0
        %v1190 = vmax.f32 %v959, 0.0
        %v1191 = vmax.f32 %v963, 0.0
        %v1192 = vmax.f32 %v965, 0.0
        %v1193 = vmax.f32 %v967, 0.0
        %v1194 = vmax.f32 %v969, 0.0
        %v1195 = vmax.f32 %v973, 0.0
        %v1196 = vmax.f32 %v975, 0.0
        %v1197 = vmax.f32 %v977, 0.0
        %v1198 = vmax.f32 %v979, 0.0
        %v1199 = vmax.f32 %v983, 0.0
        %v1200 = vmax.f32 %v985, 0.0
        %v1201 = vmax.f32 %v987, 0.0
        %v1202 = vmax.f32 %v989, 0.0
        %v1203 = vmax.f32 %v993, 0.0
        %v1204 = vmax.f32 %v995, 0.0
        %v1205 = vmax.f32 %v997, 0.0
        %v1206 = vmax.f32 %v999, 0.0
        %v1207 = vmax.f32 %v1003, 0.0
        %v1208 = vmax.f32 %v1005, 0.0
        %v1209 = vmax.f32 %v1007, 0.0
        %v1210 = vmax.f32 %v1009, 0.0
        %v1211 = vmax.f32 %v1013, 0.0
        %v1212 = vmax.f32 %v1015, 0.0
        %v1213 = vmax.f32 %v1017, 0.0
        %v1214 = vmax.f32 %v1019, 0.0
        %v1215 = vmax.f32 %v1023, 0.0
        %v1216 = vmax.f32 %v1025, 0.0
        %v1217 = vmax.f32 %v1027, 0.0
        %v1218 = vmax.f32 %v1029, 0.0
        %v1219 = vmax.f32 %v1033, 0.0
        %v1220 = vmax.f32 %v1035, 0.0
        %v1221 = vmax.f32 %v1037, 0.0
        %v1222 = vmax.f32 %v1039, 0.0
        %v1223 = vmax.f32 %v1043, 0.0
        %v1224 = vmax.f32 %v1045, 0.0
        %v1225 = vmax.f32 %v1047, 0.0
        %v1226 = vmax.f32 %v1049, 0.0
        %v1227 = vmax.f32 %v1053, 0.0
        %v1228 = vmax.f32 %v1055, 0.0
        %v1229 = vmax.f32 %v1057, 0.0
        %v1230 = vmax.f32 %v1059, 0.0
        %v1231 = vmax.f32 %v1063, 0.0
        %v1232 = vmax.f32 %v1065, 0.0
        %v1233 = vmax.f32 %v1067, 0.0
        %v1234 = vmax.f32 %v1069, 0.0
        %v1235 = vmax.f32 %v1073, 0.0
        %v1236 = vmax.f32 %v1075, 0.0
        %v1237 = vmax.f32 %v1077, 0.0
        %v1238 = vmax.f32 %v1079, 0.0
        %v1239 = vmax.f32 %v1083, 0.0
        %v1240 = vmax.f32 %v1085, 0.0
        %v1241 = vmax.f32 %v1087, 0.0
        %v1242 = vmax.f32 %v1089, 0.0
        %v1243 = vmax.f32 %v1093, 0.0
        %v1244 = vmax.f32 %v1095, 0.0
        %v1245 = vmax.f32 %v1097, 0.0
        %v1246 = vmax.f32 %v1099, 0.0
        %v1247 = vmax.f32 %v1103, 0.0
        %v1248 = vmax.f32 %v1105, 0.0
        %v1249 = vmax.f32 %v1107, 0.0
        %v1250 = vmax.f32 %v1109, 0.0
        %v1251 = vmax.f32 %v1113, 0.0
        %v1252 = vmax.f32 %v1115, 0.0
        %v1253 = vmax.f32 %v1117, 0.0
        %v1254 = vmax.f32 %v1119, 0.0
        %v1255 = vmax.f32 %v1123, 0.0
        %v1256 = vmax.f32 %v1125, 0.0
        %v1257 = vmax.f32 %v1127, 0.0
        %v1258 = vmax.f32 %v1129, 0.0
        %v1260 = vlaneseq
        %v1261 = vshrl.u32 %v1260, 7
        %v1262 = vsub.s32 0, %v1261
        %v1263 = vrot.slane %v507, %v1262
        %v1264 = vlaneseq
        %v1265 = vshrl.u32 %v1264, 7
        %v1266 = vsub.s32 1, %v1265
        %v1267 = vrot.slane %v507, %v1266
        %v1268 = vlaneseq
        %v1269 = vshrl.u32 %v1268, 7
        %v1270 = vsub.s32 2, %v1269
        %v1271 = vrot.slane %v507, %v1270
        %v1272 = vlaneseq
        %v1273 = vshrl.u32 %v1272, 7
        %v1274 = vsub.s32 3, %v1273
        %v1275 = vrot.slane %v507, %v1274
        %1280 = vmatprep.subr.mxu0 %v1162
        %1281 = vmatpush1.msra.mxu0 %v1161
        %1282 = vmatprep.subr.mxu0 %v1160
        %1283 = vmatpush1.msra.mxu0 %v1159
        %1284 = vmatprep.subr.mxu0 %v1158
        %1285 = vmatpush1.msra.mxu0 %v1157
        %1286 = vmatprep.subr.mxu0 %v1156
        %1287 = vmatpush1.msra.mxu0 %v1155
        %1288 = vmatprep.subr.mxu0 %v1154
        %1289 = vmatpush1.msra.mxu0 %v1153
        %1290 = vmatprep.subr.mxu0 %v1152
        %1291 = vmatpush1.msra.mxu0 %v1151
        %1292 = vmatprep.subr.mxu0 %v1150
        %1293 = vmatpush1.msra.mxu0 %v1149
        %1294 = vmatprep.subr.mxu0 %v1148
        %1295 = vmatpush1.msra.mxu0 %v1147
        %1296 = vmatprep.subr.mxu0 %v1146
        %1297 = vmatpush1.msra.mxu0 %v1145
        %1298 = vmatprep.subr.mxu0 %v1144
        %1299 = vmatpush1.msra.mxu0 %v1143
        %1300 = vmatprep.subr.mxu0 %v1142
        %1301 = vmatpush1.msra.mxu0 %v1141
        %1302 = vmatprep.subr.mxu0 %v1140
        %1303 = vmatpush1.msra.mxu0 %v1139
        %1304 = vmatprep.subr.mxu0 %v1138
        %1305 = vmatpush1.msra.mxu0 %v1137
        %1306 = vmatprep.subr.mxu0 %v1136
        %1307 = vmatpush1.msra.mxu0 %v1135
        %1308 = vmatprep.subr.mxu0 %v1134
        %1309 = vmatpush1.msra.mxu0 %v1133
        %1310 = vmatprep.subr.mxu0 %v1132
        %1311 = vmatpush1.msra.mxu0 %v1131
        %1312 = vmatprep.subr.mxu0 %v1194
        %1313 = vmatpush2.msra.mxu0 %v1193
        %1314 = vmatprep.subr.mxu0 %v1192
        %1315 = vmatpush2.msra.mxu0 %v1191
        %1316 = vmatprep.subr.mxu0 %v1190
        %1317 = vmatpush2.msra.mxu0 %v1189
        %1318 = vmatprep.subr.mxu0 %v1188
        %1319 = vmatpush2.msra.mxu0 %v1187
        %1320 = vmatprep.subr.mxu0 %v1186
        %1321 = vmatpush2.msra.mxu0 %v1185
        %1322 = vmatprep.subr.mxu0 %v1184
        %1323 = vmatpush2.msra.mxu0 %v1183
        %1324 = vmatprep.subr.mxu0 %v1182
        %1325 = vmatpush2.msra.mxu0 %v1181
        %1326 = vmatprep.subr.mxu0 %v1180
        %1327 = vmatpush2.msra.mxu0 %v1179
        %1328 = vmatprep.subr.mxu0 %v1178
        %1329 = vmatpush2.msra.mxu0 %v1177
        %1330 = vmatprep.subr.mxu0 %v1176
        %1331 = vmatpush2.msra.mxu0 %v1175
        %1332 = vmatprep.subr.mxu0 %v1174
        %1333 = vmatpush2.msra.mxu0 %v1173
        %1334 = vmatprep.subr.mxu0 %v1172
        %1335 = vmatpush2.msra.mxu0 %v1171
        %1336 = vmatprep.subr.mxu0 %v1170
        %1337 = vmatpush2.msra.mxu0 %v1169
        %1338 = vmatprep.subr.mxu0 %v1168
        %1339 = vmatpush2.msra.mxu0 %v1167
        %1340 = vmatprep.subr.mxu0 %v1166
        %1341 = vmatpush2.msra.mxu0 %v1165
        %1342 = vmatprep.subr.mxu0 %v1164
        %1343 = vmatpush2.msra.mxu0 %v1163
        %1344 = vmatprep.mubr.f32.mxu0 %v1267
        %1345 = vmatmul.mubr.f32.gmra.mxu0 %v1263
        %v1346 = vpop.f32.mrf.mxu0
        %v1347 = vadd.f32 0.0, %v1346
        %v1348 = vpop.f32.mrf.mxu0
        %v1349 = vadd.f32 0.0, %v1348
        %1350 = vdwg.mxu0
        %1351 = vmatprep.subr.mxu0 %v1226
        %1352 = vmatpush1.msra.mxu0 %v1225
        %1353 = vmatprep.subr.mxu0 %v1224
        %1354 = vmatpush1.msra.mxu0 %v1223
        %1355 = vmatprep.subr.mxu0 %v1222
        %1356 = vmatpush1.msra.mxu0 %v1221
        %1357 = vmatprep.subr.mxu0 %v1220
        %1358 = vmatpush1.msra.mxu0 %v1219
        %1359 = vmatprep.subr.mxu0 %v1218
        %1360 = vmatpush1.msra.mxu0 %v1217
        %1361 = vmatprep.subr.mxu0 %v1216
        %1362 = vmatpush1.msra.mxu0 %v1215
        %1363 = vmatprep.subr.mxu0 %v1214
        %1364 = vmatpush1.msra.mxu0 %v1213
        %1365 = vmatprep.subr.mxu0 %v1212
        %1366 = vmatpush1.msra.mxu0 %v1211
        %1367 = vmatprep.subr.mxu0 %v1210
        %1368 = vmatpush1.msra.mxu0 %v1209
        %1369 = vmatprep.subr.mxu0 %v1208
        %1370 = vmatpush1.msra.mxu0 %v1207
        %1371 = vmatprep.subr.mxu0 %v1206
        %1372 = vmatpush1.msra.mxu0 %v1205
        %1373 = vmatprep.subr.mxu0 %v1204
        %1374 = vmatpush1.msra.mxu0 %v1203
        %1375 = vmatprep.subr.mxu0 %v1202
        %1376 = vmatpush1.msra.mxu0 %v1201
        %1377 = vmatprep.subr.mxu0 %v1200
        %1378 = vmatpush1.msra.mxu0 %v1199
        %1379 = vmatprep.subr.mxu0 %v1198
        %1380 = vmatpush1.msra.mxu0 %v1197
        %1381 = vmatprep.subr.mxu0 %v1196
        %1382 = vmatpush1.msra.mxu0 %v1195
        %1383 = vmatprep.subr.mxu0 %v1258
        %1384 = vmatpush2.msra.mxu0 %v1257
        %1385 = vmatprep.subr.mxu0 %v1256
        %1386 = vmatpush2.msra.mxu0 %v1255
        %1387 = vmatprep.subr.mxu0 %v1254
        %1388 = vmatpush2.msra.mxu0 %v1253
        %1389 = vmatprep.subr.mxu0 %v1252
        %1390 = vmatpush2.msra.mxu0 %v1251
        %1391 = vmatprep.subr.mxu0 %v1250
        %1392 = vmatpush2.msra.mxu0 %v1249
        %1393 = vmatprep.subr.mxu0 %v1248
        %1394 = vmatpush2.msra.mxu0 %v1247
        %1395 = vmatprep.subr.mxu0 %v1246
        %1396 = vmatpush2.msra.mxu0 %v1245
        %1397 = vmatprep.subr.mxu0 %v1244
        %1398 = vmatpush2.msra.mxu0 %v1243
        %1399 = vmatprep.subr.mxu0 %v1242
        %1400 = vmatpush2.msra.mxu0 %v1241
        %1401 = vmatprep.subr.mxu0 %v1240
        %1402 = vmatpush2.msra.mxu0 %v1239
        %1403 = vmatprep.subr.mxu0 %v1238
        %1404 = vmatpush2.msra.mxu0 %v1237
        %1405 = vmatprep.subr.mxu0 %v1236
        %1406 = vmatpush2.msra.mxu0 %v1235
        %1407 = vmatprep.subr.mxu0 %v1234
        %1408 = vmatpush2.msra.mxu0 %v1233
        %1409 = vmatprep.subr.mxu0 %v1232
        %1410 = vmatpush2.msra.mxu0 %v1231
        %1411 = vmatprep.subr.mxu0 %v1230
        %1412 = vmatpush2.msra.mxu0 %v1229
        %1413 = vmatprep.subr.mxu0 %v1228
        %1414 = vmatpush2.msra.mxu0 %v1227
        %1415 = vmatprep.mubr.f32.mxu0 %v1275
        %1416 = vmatmul.mubr.f32.gmra.mxu0 %v1271
        %v1417 = vpop.f32.mrf.mxu0
        %v1418 = vadd.f32 %v1347, %v1417
        %v1419 = vpop.f32.mrf.mxu0
        %v1420 = vadd.f32 %v1349, %v1419
        %1421 = vdwg.mxu0
        %v1422 = vmax.f32 %v1418, 0.0
        %v1423 = vmax.f32 %v1420, 0.0
        %v1424 = vand.u32 2147483647, %v1418
        %v1425 = vand.u32 2147483647, %v1420
        %v1426 = vsub.f32 0.0, %v1424
        %v1427 = vsub.f32 0.0, %v1425
        %v1428 = vmul.f32 %v1426, 1.442695
        %v1429 = vpow.pop %v1428
        %v1430 = vmul.f32 %v1427, 1.442695
        %v1431 = vpow.pop %v1430
        %v1432 = vadd.f32 %v1429, 1.0
        %v1433 = vadd.f32 %v1431, 1.0
        %v1434 = vlog2.pop %v1432
        %v1435 = vmul.f32 %v1434, 0.6931472
        %v1436 = vlog2.pop %v1433
        %v1437 = vmul.f32 %v1436, 0.6931472
        %v1438 = vadd.f32 %v1422, %v1435
        %v1439 = vadd.f32 %v1423, %v1437
        %vm1440 = vcmask 1040384
        %v1441 = vsel %vm1440, %v1438, 0.0
        %v1442 = vsel %vm1440, %v1439, 0.0
        %v1443 = vadd.f32 %v1441, %v1442
        %1444 = vadd.xlane.f32.xlu0 %v1443
        %v1445 = vpop.xlane.xlu0 %1444
        %v1446 = vrot.slane %v1445, 4
        %v1447 = vadd.f32 %v1445, %v1446
        %v1448 = vrot.slane %v1447, 2
        %v1449 = vadd.f32 %v1447, %v1448
        %v1450 = vrot.slane %v1449, 1
        %v1451 = vadd.f32 %v1449, %v1450
        %s1452 = vtos %v1451
        %v1453 = vstv %s1452
        %v1454 = vadd.f32 %v1453, 0.0
        %v1455 = vld [vmem:[#allocation3] sm:$0xff]
        %v1457 = vunpack.c.l.b16 %v1455
        %v1458 = vunpack.c.h.b16 %v1455
        %v1459 = vpack.c.b16 %v1457, %v1457
        %v1460 = vpack.c.b16 %v1458, %v1458
        %v1462 = vsel %vm771, %v1459, 0
        %v1465 = vsel %vm771, %v1460, 0
        %1467 = vmatprep.subr.bf16.mxu0 0
        %1468 = vmatpush1.bf16.msra.mxu0 0
        %1469 = vmatprep.subr.bf16.mxu0 0
        %1470 = vmatpush1.bf16.msra.mxu0 0
        %1471 = vmatprep.subr.bf16.mxu0 0
        %1472 = vmatpush1.bf16.msra.mxu0 0
        %1473 = vmatprep.subr.bf16.mxu0 0
        %1474 = vmatpush1.bf16.msra.mxu0 0
        %1475 = vmatprep.subr.bf16.mxu0 0
        %1476 = vmatpush1.bf16.msra.mxu0 0
        %1477 = vmatprep.subr.bf16.mxu0 0
        %1478 = vmatpush1.bf16.msra.mxu0 0
        %1479 = vmatprep.subr.bf16.mxu0 0
        %1480 = vmatpush1.bf16.msra.mxu0 0
        %1481 = vmatprep.subr.bf16.mxu0 %v1465
        %1482 = vmatpush1.bf16.msra.mxu0 %v1462
        %1483 = vmatprep.subr.bf16.mxu0 0
        %1484 = vmatpush2.bf16.msra.mxu0 0
        %1485 = vmatprep.subr.bf16.mxu0 0
        %1486 = vmatpush2.bf16.msra.mxu0 0
        %1487 = vmatprep.subr.bf16.mxu0 0
        %1488 = vmatpush2.bf16.msra.mxu0 0
        %1489 = vmatprep.subr.bf16.mxu0 0
        %1490 = vmatpush2.bf16.msra.mxu0 0
        %1491 = vmatprep.subr.bf16.mxu0 0
        %1492 = vmatpush2.bf16.msra.mxu0 0
        %1493 = vmatprep.subr.bf16.mxu0 0
        %1494 = vmatpush2.bf16.msra.mxu0 0
        %1495 = vmatprep.subr.bf16.mxu0 0
        %1496 = vmatpush2.bf16.msra.mxu0 0
        %1497 = vmatprep.subr.bf16.mxu0 0
        %1498 = vmatpush2.bf16.msra.mxu0 0
        %1499 = vmatprep.mubr.bf16.mxu0 0
        %1500 = vmatmul.mubr.bf16.gmra.mxu0 %v676
        %v1501 = vpop.f32.mrf.mxu0
        %v1502 = vadd.f32 0.0, %v1501
        %v1503 = vpop.f32.mrf.mxu0
        %v1504 = vadd.f32 0.0, %v1503
        %v1505 = vpop.f32.mrf.mxu0
        %v1506 = vadd.f32 0.0, %v1505
        %v1507 = vpop.f32.mrf.mxu0
        %v1508 = vadd.f32 0.0, %v1507
        %1509 = vmatprep.mubr.bf16.mxu0 0
        %1510 = vmatmul.mubr.bf16.gmra.mxu0 %v679
        %v1511 = vpop.f32.mrf.mxu0
        %v1512 = vadd.f32 0.0, %v1511
        %v1513 = vpop.f32.mrf.mxu0
        %v1514 = vadd.f32 0.0, %v1513
        %v1515 = vpop.f32.mrf.mxu0
        %v1516 = vadd.f32 0.0, %v1515
        %v1517 = vpop.f32.mrf.mxu0
        %v1518 = vadd.f32 0.0, %v1517
        %1519 = vmatprep.mubr.bf16.mxu0 0
        %1520 = vmatmul.mubr.bf16.gmra.mxu0 %v682
        %v1521 = vpop.f32.mrf.mxu0
        %v1522 = vadd.f32 0.0, %v1521
        %v1523 = vpop.f32.mrf.mxu0
        %v1524 = vadd.f32 0.0, %v1523
        %v1525 = vpop.f32.mrf.mxu0
        %v1526 = vadd.f32 0.0, %v1525
        %v1527 = vpop.f32.mrf.mxu0
        %v1528 = vadd.f32 0.0, %v1527
        %1529 = vmatprep.mubr.bf16.mxu0 0
        %1530 = vmatmul.mubr.bf16.gmra.mxu0 %v685
        %v1531 = vpop.f32.mrf.mxu0
        %v1532 = vadd.f32 0.0, %v1531
        %v1533 = vpop.f32.mrf.mxu0
        %v1534 = vadd.f32 0.0, %v1533
        %v1535 = vpop.f32.mrf.mxu0
        %v1536 = vadd.f32 0.0, %v1535
        %v1537 = vpop.f32.mrf.mxu0
        %v1538 = vadd.f32 0.0, %v1537
        %1539 = vmatprep.mubr.bf16.mxu0 0
        %1540 = vmatmul.mubr.bf16.gmra.mxu0 %v688
        %v1541 = vpop.f32.mrf.mxu0
        %v1542 = vadd.f32 0.0, %v1541
        %v1543 = vpop.f32.mrf.mxu0
        %v1544 = vadd.f32 0.0, %v1543
        %v1545 = vpop.f32.mrf.mxu0
        %v1546 = vadd.f32 0.0, %v1545
        %v1547 = vpop.f32.mrf.mxu0
        %v1548 = vadd.f32 0.0, %v1547
        %1549 = vmatprep.mubr.bf16.mxu0 0
        %1550 = vmatmul.mubr.bf16.gmra.mxu0 %v691
        %v1551 = vpop.f32.mrf.mxu0
        %v1552 = vadd.f32 0.0, %v1551
        %v1553 = vpop.f32.mrf.mxu0
        %v1554 = vadd.f32 0.0, %v1553
        %v1555 = vpop.f32.mrf.mxu0
        %v1556 = vadd.f32 0.0, %v1555
        %v1557 = vpop.f32.mrf.mxu0
        %v1558 = vadd.f32 0.0, %v1557
        %1559 = vmatprep.mubr.bf16.mxu0 0
        %1560 = vmatmul.mubr.bf16.gmra.mxu0 %v694
        %v1561 = vpop.f32.mrf.mxu0
        %v1562 = vadd.f32 0.0, %v1561
        %v1563 = vpop.f32.mrf.mxu0
        %v1564 = vadd.f32 0.0, %v1563
        %v1565 = vpop.f32.mrf.mxu0
        %v1566 = vadd.f32 0.0, %v1565
        %v1567 = vpop.f32.mrf.mxu0
        %v1568 = vadd.f32 0.0, %v1567
        %1569 = vmatprep.mubr.bf16.mxu0 0
        %1570 = vmatmul.mubr.bf16.gmra.mxu0 %v697
        %v1571 = vpop.f32.mrf.mxu0
        %v1572 = vadd.f32 0.0, %v1571
        %v1573 = vpop.f32.mrf.mxu0
        %v1574 = vadd.f32 0.0, %v1573
        %v1575 = vpop.f32.mrf.mxu0
        %v1576 = vadd.f32 0.0, %v1575
        %v1577 = vpop.f32.mrf.mxu0
        %v1578 = vadd.f32 0.0, %v1577
        %1579 = vmatprep.mubr.bf16.mxu0 0
        %1580 = vmatmul.mubr.bf16.gmra.mxu0 %v700
        %v1581 = vpop.f32.mrf.mxu0
        %v1582 = vadd.f32 0.0, %v1581
        %v1583 = vpop.f32.mrf.mxu0
        %v1584 = vadd.f32 0.0, %v1583
        %v1585 = vpop.f32.mrf.mxu0
        %v1586 = vadd.f32 0.0, %v1585
        %v1587 = vpop.f32.mrf.mxu0
        %v1588 = vadd.f32 0.0, %v1587
        %1589 = vmatprep.mubr.bf16.mxu0 0
        %1590 = vmatmul.mubr.bf16.gmra.mxu0 %v703
        %v1591 = vpop.f32.mrf.mxu0
        %v1592 = vadd.f32 0.0, %v1591
        %v1593 = vpop.f32.mrf.mxu0
        %v1594 = vadd.f32 0.0, %v1593
        %v1595 = vpop.f32.mrf.mxu0
        %v1596 = vadd.f32 0.0, %v1595
        %v1597 = vpop.f32.mrf.mxu0
        %v1598 = vadd.f32 0.0, %v1597
        %1599 = vmatprep.mubr.bf16.mxu0 0
        %1600 = vmatmul.mubr.bf16.gmra.mxu0 %v706
        %v1601 = vpop.f32.mrf.mxu0
        %v1602 = vadd.f32 0.0, %v1601
        %v1603 = vpop.f32.mrf.mxu0
        %v1604 = vadd.f32 0.0, %v1603
        %v1605 = vpop.f32.mrf.mxu0
        %v1606 = vadd.f32 0.0, %v1605
        %v1607 = vpop.f32.mrf.mxu0
        %v1608 = vadd.f32 0.0, %v1607
        %1609 = vmatprep.mubr.bf16.mxu0 0
        %1610 = vmatmul.mubr.bf16.gmra.mxu0 %v709
        %v1611 = vpop.f32.mrf.mxu0
        %v1612 = vadd.f32 0.0, %v1611
        %v1613 = vpop.f32.mrf.mxu0
        %v1614 = vadd.f32 0.0, %v1613
        %v1615 = vpop.f32.mrf.mxu0
        %v1616 = vadd.f32 0.0, %v1615
        %v1617 = vpop.f32.mrf.mxu0
        %v1618 = vadd.f32 0.0, %v1617
        %1619 = vmatprep.mubr.bf16.mxu0 0
        %1620 = vmatmul.mubr.bf16.gmra.mxu0 %v712
        %v1621 = vpop.f32.mrf.mxu0
        %v1622 = vadd.f32 0.0, %v1621
        %v1623 = vpop.f32.mrf.mxu0
        %v1624 = vadd.f32 0.0, %v1623
        %v1625 = vpop.f32.mrf.mxu0
        %v1626 = vadd.f32 0.0, %v1625
        %v1627 = vpop.f32.mrf.mxu0
        %v1628 = vadd.f32 0.0, %v1627
        %1629 = vmatprep.mubr.bf16.mxu0 0
        %1630 = vmatmul.mubr.bf16.gmra.mxu0 %v715
        %v1631 = vpop.f32.mrf.mxu0
        %v1632 = vadd.f32 0.0, %v1631
        %v1633 = vpop.f32.mrf.mxu0
        %v1634 = vadd.f32 0.0, %v1633
        %v1635 = vpop.f32.mrf.mxu0
        %v1636 = vadd.f32 0.0, %v1635
        %v1637 = vpop.f32.mrf.mxu0
        %v1638 = vadd.f32 0.0, %v1637
        %1639 = vmatprep.mubr.bf16.mxu0 0
        %1640 = vmatmul.mubr.bf16.gmra.mxu0 %v718
        %v1641 = vpop.f32.mrf.mxu0
        %v1642 = vadd.f32 0.0, %v1641
        %v1643 = vpop.f32.mrf.mxu0
        %v1644 = vadd.f32 0.0, %v1643
        %v1645 = vpop.f32.mrf.mxu0
        %v1646 = vadd.f32 0.0, %v1645
        %v1647 = vpop.f32.mrf.mxu0
        %v1648 = vadd.f32 0.0, %v1647
        %1649 = vmatprep.mubr.bf16.mxu0 0
        %1650 = vmatmul.mubr.bf16.gmra.mxu0 %v721
        %v1651 = vpop.f32.mrf.mxu0
        %v1652 = vadd.f32 0.0, %v1651
        %v1653 = vpop.f32.mrf.mxu0
        %v1654 = vadd.f32 0.0, %v1653
        %v1655 = vpop.f32.mrf.mxu0
        %v1656 = vadd.f32 0.0, %v1655
        %v1657 = vpop.f32.mrf.mxu0
        %v1658 = vadd.f32 0.0, %v1657
        %1659 = vmatprep.mubr.bf16.mxu0 0
        %1660 = vmatmul.mubr.bf16.gmra.mxu0 %v724
        %v1661 = vpop.f32.mrf.mxu0
        %v1662 = vadd.f32 0.0, %v1661
        %v1663 = vpop.f32.mrf.mxu0
        %v1664 = vadd.f32 0.0, %v1663
        %v1665 = vpop.f32.mrf.mxu0
        %v1666 = vadd.f32 0.0, %v1665
        %v1667 = vpop.f32.mrf.mxu0
        %v1668 = vadd.f32 0.0, %v1667
        %1669 = vmatprep.mubr.bf16.mxu0 0
        %1670 = vmatmul.mubr.bf16.gmra.mxu0 %v727
        %v1671 = vpop.f32.mrf.mxu0
        %v1672 = vadd.f32 0.0, %v1671
        %v1673 = vpop.f32.mrf.mxu0
        %v1674 = vadd.f32 0.0, %v1673
        %v1675 = vpop.f32.mrf.mxu0
        %v1676 = vadd.f32 0.0, %v1675
        %v1677 = vpop.f32.mrf.mxu0
        %v1678 = vadd.f32 0.0, %v1677
        %1679 = vmatprep.mubr.bf16.mxu0 0
        %1680 = vmatmul.mubr.bf16.gmra.mxu0 %v730
        %v1681 = vpop.f32.mrf.mxu0
        %v1682 = vadd.f32 0.0, %v1681
        %v1683 = vpop.f32.mrf.mxu0
        %v1684 = vadd.f32 0.0, %v1683
        %v1685 = vpop.f32.mrf.mxu0
        %v1686 = vadd.f32 0.0, %v1685
        %v1687 = vpop.f32.mrf.mxu0
        %v1688 = vadd.f32 0.0, %v1687
        %1689 = vmatprep.mubr.bf16.mxu0 0
        %1690 = vmatmul.mubr.bf16.gmra.mxu0 %v733
        %v1691 = vpop.f32.mrf.mxu0
        %v1692 = vadd.f32 0.0, %v1691
        %v1693 = vpop.f32.mrf.mxu0
        %v1694 = vadd.f32 0.0, %v1693
        %v1695 = vpop.f32.mrf.mxu0
        %v1696 = vadd.f32 0.0, %v1695
        %v1697 = vpop.f32.mrf.mxu0
        %v1698 = vadd.f32 0.0, %v1697
        %1699 = vmatprep.mubr.bf16.mxu0 0
        %1700 = vmatmul.mubr.bf16.gmra.mxu0 %v736
        %v1701 = vpop.f32.mrf.mxu0
        %v1702 = vadd.f32 0.0, %v1701
        %v1703 = vpop.f32.mrf.mxu0
        %v1704 = vadd.f32 0.0, %v1703
        %v1705 = vpop.f32.mrf.mxu0
        %v1706 = vadd.f32 0.0, %v1705
        %v1707 = vpop.f32.mrf.mxu0
        %v1708 = vadd.f32 0.0, %v1707
        %1709 = vmatprep.mubr.bf16.mxu0 0
        %1710 = vmatmul.mubr.bf16.gmra.mxu0 %v739
        %v1711 = vpop.f32.mrf.mxu0
        %v1712 = vadd.f32 0.0, %v1711
        %v1713 = vpop.f32.mrf.mxu0
        %v1714 = vadd.f32 0.0, %v1713
        %v1715 = vpop.f32.mrf.mxu0
        %v1716 = vadd.f32 0.0, %v1715
        %v1717 = vpop.f32.mrf.mxu0
        %v1718 = vadd.f32 0.0, %v1717
        %1719 = vmatprep.mubr.bf16.mxu0 0
        %1720 = vmatmul.mubr.bf16.gmra.mxu0 %v742
        %v1721 = vpop.f32.mrf.mxu0
        %v1722 = vadd.f32 0.0, %v1721
        %v1723 = vpop.f32.mrf.mxu0
        %v1724 = vadd.f32 0.0, %v1723
        %v1725 = vpop.f32.mrf.mxu0
        %v1726 = vadd.f32 0.0, %v1725
        %v1727 = vpop.f32.mrf.mxu0
        %v1728 = vadd.f32 0.0, %v1727
        %1729 = vmatprep.mubr.bf16.mxu0 0
        %1730 = vmatmul.mubr.bf16.gmra.mxu0 %v745
        %v1731 = vpop.f32.mrf.mxu0
        %v1732 = vadd.f32 0.0, %v1731
        %v1733 = vpop.f32.mrf.mxu0
        %v1734 = vadd.f32 0.0, %v1733
        %v1735 = vpop.f32.mrf.mxu0
        %v1736 = vadd.f32 0.0, %v1735
        %v1737 = vpop.f32.mrf.mxu0
        %v1738 = vadd.f32 0.0, %v1737
        %1739 = vmatprep.mubr.bf16.mxu0 0
        %1740 = vmatmul.mubr.bf16.gmra.mxu0 %v748
        %v1741 = vpop.f32.mrf.mxu0
        %v1742 = vadd.f32 0.0, %v1741
        %v1743 = vpop.f32.mrf.mxu0
        %v1744 = vadd.f32 0.0, %v1743
        %v1745 = vpop.f32.mrf.mxu0
        %v1746 = vadd.f32 0.0, %v1745
        %v1747 = vpop.f32.mrf.mxu0
        %v1748 = vadd.f32 0.0, %v1747
        %1749 = vmatprep.mubr.bf16.mxu0 0
        %1750 = vmatmul.mubr.bf16.gmra.mxu0 %v751
        %v1751 = vpop.f32.mrf.mxu0
        %v1752 = vadd.f32 0.0, %v1751
        %v1753 = vpop.f32.mrf.mxu0
        %v1754 = vadd.f32 0.0, %v1753
        %v1755 = vpop.f32.mrf.mxu0
        %v1756 = vadd.f32 0.0, %v1755
        %v1757 = vpop.f32.mrf.mxu0
        %v1758 = vadd.f32 0.0, %v1757
        %1759 = vmatprep.mubr.bf16.mxu0 0
        %1760 = vmatmul.mubr.bf16.gmra.mxu0 %v754
        %v1761 = vpop.f32.mrf.mxu0
        %v1762 = vadd.f32 0.0, %v1761
        %v1763 = vpop.f32.mrf.mxu0
        %v1764 = vadd.f32 0.0, %v1763
        %v1765 = vpop.f32.mrf.mxu0
        %v1766 = vadd.f32 0.0, %v1765
        %v1767 = vpop.f32.mrf.mxu0
        %v1768 = vadd.f32 0.0, %v1767
        %1769 = vmatprep.mubr.bf16.mxu0 0
        %1770 = vmatmul.mubr.bf16.gmra.mxu0 %v757
        %v1771 = vpop.f32.mrf.mxu0
        %v1772 = vadd.f32 0.0, %v1771
        %v1773 = vpop.f32.mrf.mxu0
        %v1774 = vadd.f32 0.0, %v1773
        %v1775 = vpop.f32.mrf.mxu0
        %v1776 = vadd.f32 0.0, %v1775
        %v1777 = vpop.f32.mrf.mxu0
        %v1778 = vadd.f32 0.0, %v1777
        %1779 = vmatprep.mubr.bf16.mxu0 0
        %1780 = vmatmul.mubr.bf16.gmra.mxu0 %v760
        %v1781 = vpop.f32.mrf.mxu0
        %v1782 = vadd.f32 0.0, %v1781
        %v1783 = vpop.f32.mrf.mxu0
        %v1784 = vadd.f32 0.0, %v1783
        %v1785 = vpop.f32.mrf.mxu0
        %v1786 = vadd.f32 0.0, %v1785
        %v1787 = vpop.f32.mrf.mxu0
        %v1788 = vadd.f32 0.0, %v1787
        %1789 = vmatprep.mubr.bf16.mxu0 0
        %1790 = vmatmul.mubr.bf16.gmra.mxu0 %v763
        %v1791 = vpop.f32.mrf.mxu0
        %v1792 = vadd.f32 0.0, %v1791
        %v1793 = vpop.f32.mrf.mxu0
        %v1794 = vadd.f32 0.0, %v1793
        %v1795 = vpop.f32.mrf.mxu0
        %v1796 = vadd.f32 0.0, %v1795
        %v1797 = vpop.f32.mrf.mxu0
        %v1798 = vadd.f32 0.0, %v1797
        %1799 = vmatprep.mubr.bf16.mxu0 0
        %1800 = vmatmul.mubr.bf16.gmra.mxu0 %v766
        %v1801 = vpop.f32.mrf.mxu0
        %v1802 = vadd.f32 0.0, %v1801
        %v1803 = vpop.f32.mrf.mxu0
        %v1804 = vadd.f32 0.0, %v1803
        %v1805 = vpop.f32.mrf.mxu0
        %v1806 = vadd.f32 0.0, %v1805
        %v1807 = vpop.f32.mrf.mxu0
        %v1808 = vadd.f32 0.0, %v1807
        %1809 = vmatprep.mubr.bf16.mxu0 0
        %1810 = vmatmul.mubr.bf16.gmra.mxu0 %v769
        %v1811 = vpop.f32.mrf.mxu0
        %v1812 = vadd.f32 0.0, %v1811
        %v1813 = vpop.f32.mrf.mxu0
        %v1814 = vadd.f32 0.0, %v1813
        %v1815 = vpop.f32.mrf.mxu0
        %v1816 = vadd.f32 0.0, %v1815
        %v1817 = vpop.f32.mrf.mxu0
        %v1818 = vadd.f32 0.0, %v1817
        %1819 = vdwg.mxu0
        %v1820 = vmax.f32 %v1502, 0.0
        %v1821 = vmax.f32 %v1504, 0.0
        %v1822 = vmax.f32 %v1506, 0.0
        %v1823 = vmax.f32 %v1508, 0.0
        %v1824 = vmax.f32 %v1512, 0.0
        %v1825 = vmax.f32 %v1514, 0.0
        %v1826 = vmax.f32 %v1516, 0.0
        %v1827 = vmax.f32 %v1518, 0.0
        %v1828 = vmax.f32 %v1522, 0.0
        %v1829 = vmax.f32 %v1524, 0.0
        %v1830 = vmax.f32 %v1526, 0.0
        %v1831 = vmax.f32 %v1528, 0.0
        %v1832 = vmax.f32 %v1532, 0.0
        %v1833 = vmax.f32 %v1534, 0.0
        %v1834 = vmax.f32 %v1536, 0.0
        %v1835 = vmax.f32 %v1538, 0.0
        %v1836 = vmax.f32 %v1542, 0.0
        %v1837 = vmax.f32 %v1544, 0.0
        %v1838 = vmax.f32 %v1546, 0.0
        %v1839 = vmax.f32 %v1548, 0.0
        %v1840 = vmax.f32 %v1552, 0.0
        %v1841 = vmax.f32 %v1554, 0.0
        %v1842 = vmax.f32 %v1556, 0.0
        %v1843 = vmax.f32 %v1558, 0.0
        %v1844 = vmax.f32 %v1562, 0.0
        %v1845 = vmax.f32 %v1564, 0.0
        %v1846 = vmax.f32 %v1566, 0.0
        %v1847 = vmax.f32 %v1568, 0.0
        %v1848 = vmax.f32 %v1572, 0.0
        %v1849 = vmax.f32 %v1574, 0.0
        %v1850 = vmax.f32 %v1576, 0.0
        %v1851 = vmax.f32 %v1578, 0.0
        %v1852 = vmax.f32 %v1582, 0.0
        %v1853 = vmax.f32 %v1584, 0.0
        %v1854 = vmax.f32 %v1586, 0.0
        %v1855 = vmax.f32 %v1588, 0.0
        %v1856 = vmax.f32 %v1592, 0.0
        %v1857 = vmax.f32 %v1594, 0.0
        %v1858 = vmax.f32 %v1596, 0.0
        %v1859 = vmax.f32 %v1598, 0.0
        %v1860 = vmax.f32 %v1602, 0.0
        %v1861 = vmax.f32 %v1604, 0.0
        %v1862 = vmax.f32 %v1606, 0.0
        %v1863 = vmax.f32 %v1608, 0.0
        %v1864 = vmax.f32 %v1612, 0.0
        %v1865 = vmax.f32 %v1614, 0.0
        %v1866 = vmax.f32 %v1616, 0.0
        %v1867 = vmax.f32 %v1618, 0.0
        %v1868 = vmax.f32 %v1622, 0.0
        %v1869 = vmax.f32 %v1624, 0.0
        %v1870 = vmax.f32 %v1626, 0.0
        %v1871 = vmax.f32 %v1628, 0.0
        %v1872 = vmax.f32 %v1632, 0.0
        %v1873 = vmax.f32 %v1634, 0.0
        %v1874 = vmax.f32 %v1636, 0.0
        %v1875 = vmax.f32 %v1638, 0.0
        %v1876 = vmax.f32 %v1642, 0.0
        %v1877 = vmax.f32 %v1644, 0.0
        %v1878 = vmax.f32 %v1646, 0.0
        %v1879 = vmax.f32 %v1648, 0.0
        %v1880 = vmax.f32 %v1652, 0.0
        %v1881 = vmax.f32 %v1654, 0.0
        %v1882 = vmax.f32 %v1656, 0.0
        %v1883 = vmax.f32 %v1658, 0.0
        %v1884 = vmax.f32 %v1662, 0.0
        %v1885 = vmax.f32 %v1664, 0.0
        %v1886 = vmax.f32 %v1666, 0.0
        %v1887 = vmax.f32 %v1668, 0.0
        %v1888 = vmax.f32 %v1672, 0.0
        %v1889 = vmax.f32 %v1674, 0.0
        %v1890 = vmax.f32 %v1676, 0.0
        %v1891 = vmax.f32 %v1678, 0.0
        %v1892 = vmax.f32 %v1682, 0.0
        %v1893 = vmax.f32 %v1684, 0.0
        %v1894 = vmax.f32 %v1686, 0.0
        %v1895 = vmax.f32 %v1688, 0.0
        %v1896 = vmax.f32 %v1692, 0.0
        %v1897 = vmax.f32 %v1694, 0.0
        %v1898 = vmax.f32 %v1696, 0.0
        %v1899 = vmax.f32 %v1698, 0.0
        %v1900 = vmax.f32 %v1702, 0.0
        %v1901 = vmax.f32 %v1704, 0.0
        %v1902 = vmax.f32 %v1706, 0.0
        %v1903 = vmax.f32 %v1708, 0.0
        %v1904 = vmax.f32 %v1712, 0.0
        %v1905 = vmax.f32 %v1714, 0.0
        %v1906 = vmax.f32 %v1716, 0.0
        %v1907 = vmax.f32 %v1718, 0.0
        %v1908 = vmax.f32 %v1722, 0.0
        %v1909 = vmax.f32 %v1724, 0.0
        %v1910 = vmax.f32 %v1726, 0.0
        %v1911 = vmax.f32 %v1728, 0.0
        %v1912 = vmax.f32 %v1732, 0.0
        %v1913 = vmax.f32 %v1734, 0.0
        %v1914 = vmax.f32 %v1736, 0.0
        %v1915 = vmax.f32 %v1738, 0.0
        %v1916 = vmax.f32 %v1742, 0.0
        %v1917 = vmax.f32 %v1744, 0.0
        %v1918 = vmax.f32 %v1746, 0.0
        %v1919 = vmax.f32 %v1748, 0.0
        %v1920 = vmax.f32 %v1752, 0.0
        %v1921 = vmax.f32 %v1754, 0.0
        %v1922 = vmax.f32 %v1756, 0.0
        %v1923 = vmax.f32 %v1758, 0.0
        %v1924 = vmax.f32 %v1762, 0.0
        %v1925 = vmax.f32 %v1764, 0.0
        %v1926 = vmax.f32 %v1766, 0.0
        %v1927 = vmax.f32 %v1768, 0.0
        %v1928 = vmax.f32 %v1772, 0.0
        %v1929 = vmax.f32 %v1774, 0.0
        %v1930 = vmax.f32 %v1776, 0.0
        %v1931 = vmax.f32 %v1778, 0.0
        %v1932 = vmax.f32 %v1782, 0.0
        %v1933 = vmax.f32 %v1784, 0.0
        %v1934 = vmax.f32 %v1786, 0.0
        %v1935 = vmax.f32 %v1788, 0.0
        %v1936 = vmax.f32 %v1792, 0.0
        %v1937 = vmax.f32 %v1794, 0.0
        %v1938 = vmax.f32 %v1796, 0.0
        %v1939 = vmax.f32 %v1798, 0.0
        %v1940 = vmax.f32 %v1802, 0.0
        %v1941 = vmax.f32 %v1804, 0.0
        %v1942 = vmax.f32 %v1806, 0.0
        %v1943 = vmax.f32 %v1808, 0.0
        %v1944 = vmax.f32 %v1812, 0.0
        %v1945 = vmax.f32 %v1814, 0.0
        %v1946 = vmax.f32 %v1816, 0.0
        %v1947 = vmax.f32 %v1818, 0.0
        %1948 = vmatprep.subr.mxu0 %v1851
        %1949 = vmatpush1.msra.mxu0 %v1850
        %1950 = vmatprep.subr.mxu0 %v1849
        %1951 = vmatpush1.msra.mxu0 %v1848
        %1952 = vmatprep.subr.mxu0 %v1847
        %1953 = vmatpush1.msra.mxu0 %v1846
        %1954 = vmatprep.subr.mxu0 %v1845
        %1955 = vmatpush1.msra.mxu0 %v1844
        %1956 = vmatprep.subr.mxu0 %v1843
        %1957 = vmatpush1.msra.mxu0 %v1842
        %1958 = vmatprep.subr.mxu0 %v1841
        %1959 = vmatpush1.msra.mxu0 %v1840
        %1960 = vmatprep.subr.mxu0 %v1839
        %1961 = vmatpush1.msra.mxu0 %v1838
        %1962 = vmatprep.subr.mxu0 %v1837
        %1963 = vmatpush1.msra.mxu0 %v1836
        %1964 = vmatprep.subr.mxu0 %v1835
        %1965 = vmatpush1.msra.mxu0 %v1834
        %1966 = vmatprep.subr.mxu0 %v1833
        %1967 = vmatpush1.msra.mxu0 %v1832
        %1968 = vmatprep.subr.mxu0 %v1831
        %1969 = vmatpush1.msra.mxu0 %v1830
        %1970 = vmatprep.subr.mxu0 %v1829
        %1971 = vmatpush1.msra.mxu0 %v1828
        %1972 = vmatprep.subr.mxu0 %v1827
        %1973 = vmatpush1.msra.mxu0 %v1826
        %1974 = vmatprep.subr.mxu0 %v1825
        %1975 = vmatpush1.msra.mxu0 %v1824
        %1976 = vmatprep.subr.mxu0 %v1823
        %1977 = vmatpush1.msra.mxu0 %v1822
        %1978 = vmatprep.subr.mxu0 %v1821
        %1979 = vmatpush1.msra.mxu0 %v1820
        %1980 = vmatprep.subr.mxu0 %v1883
        %1981 = vmatpush2.msra.mxu0 %v1882
        %1982 = vmatprep.subr.mxu0 %v1881
        %1983 = vmatpush2.msra.mxu0 %v1880
        %1984 = vmatprep.subr.mxu0 %v1879
        %1985 = vmatpush2.msra.mxu0 %v1878
        %1986 = vmatprep.subr.mxu0 %v1877
        %1987 = vmatpush2.msra.mxu0 %v1876
        %1988 = vmatprep.subr.mxu0 %v1875
        %1989 = vmatpush2.msra.mxu0 %v1874
        %1990 = vmatprep.subr.mxu0 %v1873
        %1991 = vmatpush2.msra.mxu0 %v1872
        %1992 = vmatprep.subr.mxu0 %v1871
        %1993 = vmatpush2.msra.mxu0 %v1870
        %1994 = vmatprep.subr.mxu0 %v1869
        %1995 = vmatpush2.msra.mxu0 %v1868
        %1996 = vmatprep.subr.mxu0 %v1867
        %1997 = vmatpush2.msra.mxu0 %v1866
        %1998 = vmatprep.subr.mxu0 %v1865
        %1999 = vmatpush2.msra.mxu0 %v1864
        %2000 = vmatprep.subr.mxu0 %v1863
        %2001 = vmatpush2.msra.mxu0 %v1862
        %2002 = vmatprep.subr.mxu0 %v1861
        %2003 = vmatpush2.msra.mxu0 %v1860
        %2004 = vmatprep.subr.mxu0 %v1859
        %2005 = vmatpush2.msra.mxu0 %v1858
        %2006 = vmatprep.subr.mxu0 %v1857
        %2007 = vmatpush2.msra.mxu0 %v1856
        %2008 = vmatprep.subr.mxu0 %v1855
        %2009 = vmatpush2.msra.mxu0 %v1854
        %2010 = vmatprep.subr.mxu0 %v1853
        %2011 = vmatpush2.msra.mxu0 %v1852
        %2012 = vmatprep.mubr.f32.mxu0 %v1267
        %2013 = vmatmul.mubr.f32.gmra.mxu0 %v1263
        %v2014 = vpop.f32.mrf.mxu0
        %v2015 = vadd.f32 0.0, %v2014
        %v2016 = vpop.f32.mrf.mxu0
        %v2017 = vadd.f32 0.0, %v2016
        %2018 = vdwg.mxu0
        %2019 = vmatprep.subr.mxu0 %v1915
        %2020 = vmatpush1.msra.mxu0 %v1914
        %2021 = vmatprep.subr.mxu0 %v1913
        %2022 = vmatpush1.msra.mxu0 %v1912
        %2023 = vmatprep.subr.mxu0 %v1911
        %2024 = vmatpush1.msra.mxu0 %v1910
        %2025 = vmatprep.subr.mxu0 %v1909
        %2026 = vmatpush1.msra.mxu0 %v1908
        %2027 = vmatprep.subr.mxu0 %v1907
        %2028 = vmatpush1.msra.mxu0 %v1906
        %2029 = vmatprep.subr.mxu0 %v1905
        %2030 = vmatpush1.msra.mxu0 %v1904
        %2031 = vmatprep.subr.mxu0 %v1903
        %2032 = vmatpush1.msra.mxu0 %v1902
        %2033 = vmatprep.subr.mxu0 %v1901
        %2034 = vmatpush1.msra.mxu0 %v1900
        %2035 = vmatprep.subr.mxu0 %v1899
        %2036 = vmatpush1.msra.mxu0 %v1898
        %2037 = vmatprep.subr.mxu0 %v1897
        %2038 = vmatpush1.msra.mxu0 %v1896
        %2039 = vmatprep.subr.mxu0 %v1895
        %2040 = vmatpush1.msra.mxu0 %v1894
        %2041 = vmatprep.subr.mxu0 %v1893
        %2042 = vmatpush1.msra.mxu0 %v1892
        %2043 = vmatprep.subr.mxu0 %v1891
        %2044 = vmatpush1.msra.mxu0 %v1890
        %2045 = vmatprep.subr.mxu0 %v1889
        %2046 = vmatpush1.msra.mxu0 %v1888
        %2047 = vmatprep.subr.mxu0 %v1887
        %2048 = vmatpush1.msra.mxu0 %v1886
        %2049 = vmatprep.subr.mxu0 %v1885
        %2050 = vmatpush1.msra.mxu0 %v1884
        %2051 = vmatprep.subr.mxu0 %v1947
        %2052 = vmatpush2.msra.mxu0 %v1946
        %2053 = vmatprep.subr.mxu0 %v1945
        %2054 = vmatpush2.msra.mxu0 %v1944
        %2055 = vmatprep.subr.mxu0 %v1943
        %2056 = vmatpush2.msra.mxu0 %v1942
        %2057 = vmatprep.subr.mxu0 %v1941
        %2058 = vmatpush2.msra.mxu0 %v1940
        %2059 = vmatprep.subr.mxu0 %v1939
        %2060 = vmatpush2.msra.mxu0 %v1938
        %2061 = vmatprep.subr.mxu0 %v1937
        %2062 = vmatpush2.msra.mxu0 %v1936
        %2063 = vmatprep.subr.mxu0 %v1935
        %2064 = vmatpush2.msra.mxu0 %v1934
        %2065 = vmatprep.subr.mxu0 %v1933
        %2066 = vmatpush2.msra.mxu0 %v1932
        %2067 = vmatprep.subr.mxu0 %v1931
        %2068 = vmatpush2.msra.mxu0 %v1930
        %2069 = vmatprep.subr.mxu0 %v1929
        %2070 = vmatpush2.msra.mxu0 %v1928
        %2071 = vmatprep.subr.mxu0 %v1927
        %2072 = vmatpush2.msra.mxu0 %v1926
        %2073 = vmatprep.subr.mxu0 %v1925
        %2074 = vmatpush2.msra.mxu0 %v1924
        %2075 = vmatprep.subr.mxu0 %v1923
        %2076 = vmatpush2.msra.mxu0 %v1922
        %2077 = vmatprep.subr.mxu0 %v1921
        %2078 = vmatpush2.msra.mxu0 %v1920
        %2079 = vmatprep.subr.mxu0 %v1919
        %2080 = vmatpush2.msra.mxu0 %v1918
        %2081 = vmatprep.subr.mxu0 %v1917
        %2082 = vmatpush2.msra.mxu0 %v1916
        %2083 = vmatprep.mubr.f32.mxu0 %v1275
        %2084 = vmatmul.mubr.f32.gmra.mxu0 %v1271
        %v2085 = vpop.f32.mrf.mxu0
        %v2086 = vadd.f32 %v2015, %v2085
        %v2087 = vpop.f32.mrf.mxu0
        %v2088 = vadd.f32 %v2017, %v2087
        %2089 = vdwg.mxu0
        %v2090 = vmul.f32 %v2086, -1.0
        %v2091 = vmul.f32 %v2088, -1.0
        %v2092 = vmax.f32 %v2090, 0.0
        %v2093 = vmax.f32 %v2091, 0.0
        %v2094 = vand.u32 2147483647, %v2090
        %v2095 = vand.u32 2147483647, %v2091
        %v2096 = vsub.f32 0.0, %v2094
        %v2097 = vsub.f32 0.0, %v2095
        %v2098 = vmul.f32 %v2096, 1.442695
        %v2099 = vpow.pop %v2098
        %v2100 = vmul.f32 %v2097, 1.442695
        %v2101 = vpow.pop %v2100
        %v2102 = vadd.f32 %v2099, 1.0
        %v2103 = vadd.f32 %v2101, 1.0
        %v2104 = vlog2.pop %v2102
        %v2105 = vmul.f32 %v2104, 0.6931472
        %v2106 = vlog2.pop %v2103
        %v2107 = vmul.f32 %v2106, 0.6931472
        %v2108 = vadd.f32 %v2092, %v2105
        %v2109 = vadd.f32 %v2093, %v2107
        %v2110 = vsel %vm1440, %v2108, 0.0
        %v2111 = vsel %vm1440, %v2109, 0.0
        %v2112 = vadd.f32 %v2110, %v2111
        %2113 = vadd.xlane.f32.xlu0 %v2112
        %v2114 = vpop.xlane.xlu0 %2113
        %v2115 = vrot.slane %v2114, 4
        %v2116 = vadd.f32 %v2114, %v2115
        %v2117 = vrot.slane %v2116, 2
        %v2118 = vadd.f32 %v2116, %v2117
        %v2119 = vrot.slane %v2118, 1
        %v2120 = vadd.f32 %v2118, %v2119
        %s2121 = vtos %v2120
        %v2122 = vstv %s2121
        %v2123 = vadd.f32 %v2122, 0.0
        %v2124 = vlaneseq
        %v2125 = vand.u32 %v2124, 127
        %vm2126 = vcmp.eq.s32.totalorder %v2125, 0
        %v2127 = vstv %s388
        %v2128 = vsel %vm2126, %v2127, 0.0
        %vm2129 = vcmp.eq.s32.totalorder %v2125, 1
        %v2130 = vstv %s400
        %v2131 = vsel %vm2129, %v2130, %v2128
        %vm2132 = vcmp.eq.s32.totalorder %v2125, 2
        %v2133 = vstv %s412
        %v2134 = vsel %vm2132, %v2133, %v2131
        %vm2135 = vcmp.eq.s32.totalorder %v2125, 3
        %v2136 = vstv %s424
        %v2137 = vsel %vm2135, %v2136, %v2134
        %vm2138 = vcmp.eq.s32.totalorder %v2125, 4
        %v2139 = vsel %vm2138, %v1454, %v2137
        %vm2140 = vcmp.eq.s32.totalorder %v2125, 5
        %v2141 = vsel %vm2140, %v2123, %v2139
        %2142 = vst [vmem:[%s276] sm:$0x1] %v2141
        %s2143 = sand.u32 %s126, 1
        %s2144 = scalar_lea.sflag [#allocation5], %s2143
        %s2145 = sand.u32 %s126, 1
        %s2146 = smul.addr %s2145, 16
        %s2147 = scalar_lea.vmem [#allocation4], %s2146
        %s2148 = sand.u32 %s24, 1
        %s2149 = scalar_lea.sflag [#allocation7], %s2148
        %s2150 = sand.u32 %s152, 1
        %s2151 = smul.addr %s2150, 16
        %s2152 = scalar_lea.vmem [#allocation6], %s2151
        %s2153 = sand.u32 %s24, 1
        %s2154 = scalar_lea.sflag [#allocation7], %s2153
        %s2155 = sand.u32 %s178, 1
        %s2156 = scalar_lea.vmem [#allocation8], %s2155
        // Predicated region
        $region37: #{tpu_custom_call.1} parent=35 // pred_check
          %p2157 = pneg %p136
        $region38: #{tpu_custom_call.1} parent=35 // pred_check_branch
          %2159 = sbr.rel (%p2157) target = $region40
        $region39: #{tpu_custom_call.1} parent=35 // pred_region
          %s2161 = ssub.s32 256, 256
          %2162 = vsyncadd %s2144, %s2161
          %s2163 = smul.addr %s24, 2
          %s2164 = smul.addr %s2163, 128
          %s2165 = scalar_lea.hbm %s4, %s2164
          %s2167 = sshll.u32 %s2147, 4
          %s2168 = int_to_ptr.vmem [resolvable:$true] %s2167
          %2170 = dma.vmem_to_hbm [thread:$0]  %s2168, 256, %s2165, %s2144
        $region40: #{tpu_custom_call.1} parent=35 // pred_fallthru
          _
        // Predicated region
        $region41: #{tpu_custom_call.1} parent=35 // pred_check
          %p2171 = pneg %p162
        $region42: #{tpu_custom_call.1} parent=35 // pred_check_branch
          %2173 = sbr.rel (%p2171) target = $region44
        $region43: #{tpu_custom_call.1} parent=35 // pred_region
          %s2175 = ssub.s32 256, 256
          %2176 = vsyncadd %s2149, %s2175
          %s2177 = smul.addr %s24, 2
          %s2178 = smul.addr %s2177, 128
          %s2179 = scalar_lea.hbm %s5, %s2178
          %s2181 = sshll.u32 %s2152, 4
          %s2182 = int_to_ptr.vmem [resolvable:$true] %s2181
          %2184 = dma.vmem_to_hbm [thread:$0]  %s2182, 256, %s2179, %s2149
        $region44: #{tpu_custom_call.1} parent=35 // pred_fallthru
          _
        // Predicated region
        $region45: #{tpu_custom_call.1} parent=35 // pred_check
          %p2185 = pneg %p188
        $region46: #{tpu_custom_call.1} parent=35 // pred_check_branch
          %2187 = sbr.rel (%p2185) target = $region48
        $region47: #{tpu_custom_call.1} parent=35 // pred_region
          %s2189 = ssub.s32 16, 16
          %2190 = vsyncadd %s2154, %s2189
          %s2191 = smul.addr %s24, 16
          %s2192 = scalar_lea.hbm %s6, %s2191
          %s2194 = sshll.u32 %s2156, 4
          %s2195 = int_to_ptr.vmem [resolvable:$true] %s2194
          %2197 = dma.vmem_to_hbm [thread:$0]  %s2195, 16, %s2192, %s2154
        $region48: #{tpu_custom_call.1} parent=35 // pred_fallthru
          _
      $region36: #{tpu_custom_call.1} parent=5 // pred_fallthru
        _
      %p2198 = scmp.le.s32.totalorder 2, %s19
      // Predicated region
      $region49: #{tpu_custom_call.1} parent=5 // pred_check
        %p2199 = pneg %p2198
      $region50: #{tpu_custom_call.1} parent=5 // pred_check_branch
        %2201 = sbr.rel (%p2199) target = $region52
      $region51: #{tpu_custom_call.1} parent=5 // pred_region
        %s2202 = ssub.s32 %s19, 2
        // Predicated region
        $region53: #{tpu_custom_call.1} parent=51 // pred_check
          %p2203 = pneg %p142
        $region54: #{tpu_custom_call.1} parent=51 // pred_check_branch
          %2205 = sbr.rel (%p2203) target = $region56
        $region55: #{tpu_custom_call.1} parent=51 // pred_region
          %s2206 = sand.u32 %s127, 1
          %s2207 = scalar_lea.sflag [#allocation5], %s2206
          %s2208 = sand.u32 %s127, 1
          %s2209 = smul.addr %s2208, 16
          %s2210 = scalar_lea.vmem [#allocation4], %s2209
          %2211 = dma.done %s2207, 256
        $region56: #{tpu_custom_call.1} parent=51 // pred_fallthru
          _
        // Predicated region
        $region57: #{tpu_custom_call.1} parent=51 // pred_check
          %p2212 = pneg %p168
        $region58: #{tpu_custom_call.1} parent=51 // pred_check_branch
          %2214 = sbr.rel (%p2212) target = $region60
        $region59: #{tpu_custom_call.1} parent=51 // pred_region
          %s2215 = sand.u32 %s25, 1
          %s2216 = scalar_lea.sflag [#allocation7], %s2215
          %s2217 = sand.u32 %s153, 1
          %s2218 = smul.addr %s2217, 16
          %s2219 = scalar_lea.vmem [#allocation6], %s2218
          %2220 = dma.done %s2216, 256
        $region60: #{tpu_custom_call.1} parent=51 // pred_fallthru
          _
        // Predicated region
        $region61: #{tpu_custom_call.1} parent=51 // pred_check
          %p2221 = pneg %p194
        $region62: #{tpu_custom_call.1} parent=51 // pred_check_branch
          %2223 = sbr.rel (%p2221) target = $region64
        $region63: #{tpu_custom_call.1} parent=51 // pred_region
          %s2224 = sand.u32 %s25, 1
          %s2225 = scalar_lea.sflag [#allocation7], %s2224
          %s2226 = sand.u32 %s179, 1
          %s2227 = scalar_lea.vmem [#allocation8], %s2226
          %2228 = dma.done %s2225, 16
        $region64: #{tpu_custom_call.1} parent=51 // pred_fallthru
          _
      $region52: #{tpu_custom_call.1} parent=5 // pred_fallthru
        _
    $region6: #{tpu_custom_call.1} parent=1 // loop_footer
      %s23 = sadd.s32 1, %s19
    $region7: #{tpu_custom_call.1} parent=1 // loop_footer_branch
      %18 = sbr.rel target = $region3
    $region8: #{tpu_custom_call.1} parent=1 // loop_exit
      _
    %2229 = vsyncpa [#allocation5], 1
    %s2230 = scalar_lea.sflag [#allocation5], 1
    %2231 = vsyncpa %s2230, 1
    %2232 = vsyncpa [#allocation7], 1
    %s2233 = scalar_lea.sflag [#allocation7], 1
    %2234 = vsyncpa %s2233, 1

</llo_original>
